<compile_context>
chip_gen: v6e
topology: v6e:2x2x1
jax: 0.10.0
libtpu: 0.0.40
codegen_flags: <defaults>
</compile_context>

<pallas_src>
import jax
import jax.numpy as jnp
import numpy as np
from jax.experimental import pallas as pl
from jax.experimental.pallas import tpu as pltpu


def _silu(x):
    # f32 SiLU is safe on all generations (v5e has no bf16 VPU/EUP path).
    # TODO(synk): on v6e/v7x a bf16 SiLU would halve the elementwise passes.
    return x * jax.nn.sigmoid(x)


def _edge_tile_scatter_add(idx_ij_ref, idx_jt_ref, ac_ref, b_ref, wf_ref,
                           bias_ref, acc_ref):
    """One edge tile: fused edge/message MLP (pre-wm2) + scatter-add over idx_j."""
    tE = idx_ij_ref.shape[0]
    N = ac_ref.shape[0]
    G = b_ref.shape[0]
    H = b_ref.shape[1]

    idx_i = idx_ij_ref[:, 0:1]                                      # (tE, 1)
    idx_j = idx_ij_ref[:, 1:2]                                      # (tE, 1)

    # One-hots built directly in bf16 (0/1 exact); gather/scatter run on MXU.
    onehot_i = (jax.lax.broadcasted_iota(jnp.int32, (tE, N), 1) == idx_i
                ).astype(jnp.bfloat16)                              # (tE, N)
    onehot_j = (jax.lax.broadcasted_iota(jnp.int32, (tE, G), 1) == idx_j
                ).astype(jnp.bfloat16)                              # (tE, G)
    # Scatter one-hot built already transposed from the lane-dense (1,tE)
    # stream -> no in-kernel transpose.  (Reusing onehot_j via a dot_general
    # contracting on dim 0 risks an inserted XLU transpose, so keep this.)
    onehot_jt = (jax.lax.broadcasted_iota(jnp.int32, (G, tE), 0) == idx_jt_ref[...]
                 ).astype(jnp.bfloat16)                             # (G, tE)

    be1 = bias_ref[0:1, :]
    bm1p = bias_ref[1:2, :]

    # Single wide gather: AC = [A | C]  (N, 2H) fills the 256-wide MXU.
    ac_g = jnp.dot(onehot_i, ac_ref[...], preferred_element_type=jnp.float32)
    a_g = ac_g[:, :H]
    c_g = ac_g[:, H:]

    # edge_model L1 (decomposed):  pre1 = A[i] + B[j] + be1
    pre1 = (a_g
            + jnp.dot(onehot_j, b_ref[...], preferred_element_type=jnp.float32)
            + be1)                                                  # (tE, H) f32

    # fused edge_model L2 + message L1:  m = C[i] + silu(pre1) @ Wf + bm1'
    m = (c_g
         + jnp.dot(_silu(pre1).astype(jnp.bfloat16), wf_ref[...],
                   preferred_element_type=jnp.float32)
         + bm1p)                                                    # (tE, H) f32

    # segment-sum of silu(m) over index_j on the MXU (wm2/bm2 deferred).
    acc_ref[...] += jnp.dot(onehot_jt, _silu(m).astype(jnp.bfloat16),
                            preferred_element_type=jnp.float32)


def _finalize(mean_s, wm2_ref, wu1_ref, wu2_ref, bias_ref):
    """Deferred message L2 + update_net on the (G, H) mean."""
    bm2 = bias_ref[2:3, :]
    bu1 = bias_ref[3:4, :]
    bu2 = bias_ref[4:5, :]
    msg = jnp.dot(mean_s.astype(jnp.bfloat16), wm2_ref[...],
                  preferred_element_type=jnp.float32) + bm2
    u = jnp.dot(_silu(msg).astype(jnp.bfloat16), wu1_ref[...],
                preferred_element_type=jnp.float32) + bu1
    return (jnp.dot(_silu(u).astype(jnp.bfloat16), wu2_ref[...],
                    preferred_element_type=jnp.float32) + bu2)


def _mpnn_fused_kernel(idx_ij_ref, idx_jt_ref, ac_ref, b_ref, wf_ref,
                       wm2_ref, wu1_ref, wu2_ref, bias_ref, inv_cnt_ref,
                       out_ref, acc_ref):
    """S == 1 path: accumulate over edge tiles, finalize on the last tile."""
    t = pl.program_id(0)

    @pl.when(t == 0)
    def _():
        acc_ref[...] = jnp.zeros_like(acc_ref)

    _edge_tile_scatter_add(idx_ij_ref, idx_jt_ref, ac_ref, b_ref, wf_ref,
                           bias_ref, acc_ref)

    @pl.when(t == pl.num_programs(0) - 1)
    def _():
        mean_s = acc_ref[...] * inv_cnt_ref[...]
        out_ref[...] = _finalize(mean_s, wm2_ref, wu1_ref, wu2_ref, bias_ref)


def _mpnn_message_kernel(idx_ij_ref, idx_jt_ref, ac_ref, b_ref, wf_ref,
                         bias_ref, part_ref):
    """S > 1 path: per-split partial sums of silu(m) scattered over idx_j."""
    @pl.when(pl.program_id(1) == 0)
    def _():
        part_ref[...] = jnp.zeros_like(part_ref)
    _edge_tile_scatter_add(idx_ij_ref, idx_jt_ref, ac_ref, b_ref, wf_ref,
                           bias_ref, part_ref)


def _mpnn_update_kernel(part_ref, inv_cnt_ref, wm2_ref, wu1_ref, wu2_ref,
                        bias_ref, out_ref):
    """Reduce per-split partials, apply 1/count, deferred wm2, update_net."""
    mean_s = jnp.sum(part_ref[...], axis=0) * inv_cnt_ref[...]
    out_ref[...] = _finalize(mean_s, wm2_ref, wu1_ref, wu2_ref, bias_ref)


def mpnn_layer_forward(params, node_embedding, node_pos, grid_pos, edge_index,
                       *, edge_tile=2048, num_splits=1):
    idx_i = edge_index[0].astype(jnp.int32)
    idx_j = edge_index[1].astype(jnp.int32)
    E = idx_i.shape[0]
    N, H = node_embedding.shape
    G = grid_pos.shape[0]
    P = node_pos.shape[1]

    S = num_splits if (E % num_splits == 0) else 1
    Eps = E // S                               # edges per split
    tE = min(edge_tile, Eps)
    assert Eps % tE == 0 and tE % 128 == 0, \
        "edges-per-split must be a multiple of the edge tile (tile multiple of 128)"
    # TODO(synk): if production E needs padding, padded edges must point idx_j
    # at a dummy row (and be excluded from the counts) or they corrupt the sums.
    T = Eps // tE                              # tiles per split

    # ---- per-node / per-grid / per-weight precompute (no per-edge work) ----
    we1 = params["we1"]                                    # (2P, H)
    wm1 = params["wm1"]                                    # (2H, H)
    A = node_pos @ we1[:P]                                 # (N, H) f32
    C = node_embedding @ wm1[:H]                           # (N, H) f32
    AC = jnp.concatenate([A, C], axis=-1).astype(jnp.bfloat16)      # (N, 2H)
    B = (grid_pos @ we1[P:]).astype(jnp.bfloat16)                   # (G, H)

    Wf = (params["we2"] @ wm1[H:]).astype(jnp.bfloat16)             # (H, H)
    bm1p = params["bm1"] + params["be2"] @ wm1[H:]                  # (H,) f32

    wm2_bf = params["wm2"].astype(jnp.bfloat16)
    wu1_bf = params["wu1"].astype(jnp.bfloat16)
    wu2_bf = params["wu2"].astype(jnp.bfloat16)

    biases = jnp.zeros((8, H), jnp.float32)
    biases = (biases.at[0].set(params["be1"]).at[1].set(bm1p)
                    .at[2].set(params["bm2"]).at[3].set(params["bu1"])
                    .at[4].set(params["bu2"]))

    # bincount(index_j) precomputed; masked reciprocal -> empty grid cells get
    # 0 instead of the reference's 0/0 NaN.
    counts = jax.ops.segment_sum(jnp.ones((E,), jnp.float32), idx_j,
                                 num_segments=G)
    inv_cnt = jnp.where(counts > 0.0, 1.0 / jnp.maximum(counts, 1.0),
                        0.0)[:, None]                               # (G, 1)

    # Packed index streams: one (E, 2) column stream (single DMA / one padded
    # VMEM tile instead of two) + one lane-dense (1, E) stream for the scatter.
    idx_ij = jnp.stack([idx_i, idx_j], axis=1)             # (E, 2)
    idx_j_row = idx_j[None, :]                             # (1, E)

    vmem_limit = 48 * 1024 * 1024   # > v5e 16 MiB default, < v7x 64 MiB phys

    if S == 1:
        # Fused path: finalize (mean, wm2, update_net) inside the last tile ->
        # no second kernel launch, no partials HBM round trip.
        return pl.pallas_call(
            _mpnn_fused_kernel,
            out_shape=jax.ShapeDtypeStruct((G, H), jnp.float32),
            grid_spec=pltpu.PrefetchScalarGridSpec(
                num_scalar_prefetch=0,
                grid=(T,),
                in_specs=[
                    pl.BlockSpec((tE, 2), lambda t: (t, 0)),     # idx_i|idx_j
                    pl.BlockSpec((1, tE), lambda t: (0, t)),     # idx_j scatter
                    pl.BlockSpec((N, 2 * H), lambda t: (0, 0)),  # AC table
                    pl.BlockSpec((G, H), lambda t: (0, 0)),      # B table
                    pl.BlockSpec((H, H), lambda t: (0, 0)),      # Wf
                    pl.BlockSpec((H, H), lambda t: (0, 0)),      # wm2
                    pl.BlockSpec((H, H), lambda t: (0, 0)),      # wu1
                    pl.BlockSpec((H, H), lambda t: (0, 0)),      # wu2
                    pl.BlockSpec((8, H), lambda t: (0, 0)),      # biases
                    pl.BlockSpec((G, 1), lambda t: (0, 0)),      # 1/count
                ],
                out_specs=pl.BlockSpec((G, H), lambda t: (0, 0)),
                scratch_shapes=[pltpu.VMEM((G, H), jnp.float32)]),
            compiler_params=pltpu.CompilerParams(
                dimension_semantics=("arbitrary",),
                vmem_limit_bytes=vmem_limit),
        )(idx_ij, idx_j_row, AC, B, Wf, wm2_bf, wu1_bf, wu2_bf, biases, inv_cnt)

    # Split path (multi-TC): per-split partial sums + tiny reduce/update kernel.
    # TODO(synk): on v7x, plain "parallel" may not shard the split axis across
    # both TensorCores; use pltpu.CORE_PARALLEL / pl.core_map for guaranteed
    # 2-TC sharding.
    partials = pl.pallas_call(
        _mpnn_message_kernel,
        out_shape=jax.ShapeDtypeStruct((S, G, H), jnp.float32),
        grid_spec=pltpu.PrefetchScalarGridSpec(
            num_scalar_prefetch=0,
            grid=(S, T),
            in_specs=[
                pl.BlockSpec((tE, 2), lambda s, t: (s * T + t, 0)),
                pl.BlockSpec((1, tE), lambda s, t: (0, s * T + t)),
                pl.BlockSpec((N, 2 * H), lambda s, t: (0, 0)),
                pl.BlockSpec((G, H), lambda s, t: (0, 0)),
                pl.BlockSpec((H, H), lambda s, t: (0, 0)),
                pl.BlockSpec((8, H), lambda s, t: (0, 0)),
            ],
            out_specs=pl.BlockSpec((None, G, H), lambda s, t: (s, 0, 0)),
        ),
        compiler_params=pltpu.CompilerParams(
            dimension_semantics=("parallel", "arbitrary"),
            vmem_limit_bytes=vmem_limit),
    )(idx_ij, idx_j_row, AC, B, Wf, biases)

    out = pl.pallas_call(
        _mpnn_update_kernel,
        out_shape=jax.ShapeDtypeStruct((G, H), jnp.float32),
        grid_spec=pltpu.PrefetchScalarGridSpec(
            num_scalar_prefetch=0,
            grid=(1,),
            in_specs=[
                pl.BlockSpec((S, G, H), lambda i: (0, 0, 0)),
                pl.BlockSpec((G, 1), lambda i: (0, 0)),
                pl.BlockSpec((H, H), lambda i: (0, 0)),
                pl.BlockSpec((H, H), lambda i: (0, 0)),
                pl.BlockSpec((H, H), lambda i: (0, 0)),
                pl.BlockSpec((8, H), lambda i: (0, 0)),
            ],
            out_specs=pl.BlockSpec((G, H), lambda i: (0, 0)),
        ),
    )(partials, inv_cnt, wm2_bf, wu1_bf, wu2_bf, biases)
    return out


def init_params(key, edge_features=6, hidden=128):
    """Deterministic init mirroring nn.Linear default U(-1/sqrt(fan_in), ...)."""
    def linear(k, fan_in, fan_out):
        kw, kb = jax.random.split(k)
        bound = 1.0 / np.sqrt(fan_in)
        w = jax.random.uniform(kw, (fan_in, fan_out), jnp.float32, -bound, bound)
        b = jax.random.uniform(kb, (fan_out,), jnp.float32, -bound, bound)
        return w, b
    ks = jax.random.split(key, 6)
    we1, be1 = linear(ks[0], edge_features, hidden)
    we2, be2 = linear(ks[1], hidden, hidden)
    wm1, bm1 = linear(ks[2], 2 * hidden, hidden)
    wm2, bm2 = linear(ks[3], hidden, hidden)
    wu1, bu1 = linear(ks[4], hidden, hidden)
    wu2, bu2 = linear(ks[5], hidden, hidden)
    return dict(we1=we1, be1=be1, we2=we2, be2=be2,
                wm1=wm1, bm1=bm1, wm2=wm2, bm2=bm2,
                wu1=wu1, bu1=bu1, wu2=wu2, bu2=bu2)


def mpnn_ref(params, node_embedding, node_pos, grid_pos, edge_index):
    """Pure-JAX f32 reference matching the PyTorch forward semantics."""
    idx_i, idx_j = edge_index[0], edge_index[1]
    G = grid_pos.shape[0]
    edge_attr = jnp.concatenate([node_pos[idx_i], grid_pos[idx_j]], axis=-1)
    pos_emb = (jax.nn.silu(edge_attr @ params["we1"] + params["be1"])
               @ params["we2"] + params["be2"])
    msg_in = jnp.concatenate([node_embedding[idx_i], pos_emb], axis=-1)
    msg = (jax.nn.silu(msg_in @ params["wm1"] + params["bm1"])
           @ params["wm2"] + params["bm2"])
    summed = jax.ops.segment_sum(msg, idx_j, num_segments=G)
    cnt = jax.ops.segment_sum(jnp.ones((idx_j.shape[0],), jnp.float32),
                              idx_j, num_segments=G)
    mean = summed / cnt[:, None]
    return (jax.nn.silu(mean @ params["wu1"] + params["bu1"])
            @ params["wu2"] + params["bu2"])


if __name__ == "__main__":
    key = jax.random.PRNGKey(0)
    k_par, k_emb, k_np, k_gp = jax.random.split(key, 4)

    N, G, H, P = 16, 32, 128, 3          # nodes, grid points, hidden, pos dim
    params = init_params(k_par, edge_features=2 * P, hidden=H)

    node_embedding = jax.random.normal(k_emb, (N, H), jnp.float32)
    node_pos = jax.random.normal(k_np, (N, P), jnp.float32)
    grid_pos = jax.random.normal(k_gp, (G, P), jnp.float32)

    # fully connected node -> grid edges (every grid point receives N messages,
    # so bincount has no zeros, matching the module's implicit assumption)
    idx_i = jnp.repeat(jnp.arange(N, dtype=jnp.int32), G)
    idx_j = jnp.tile(jnp.arange(G, dtype=jnp.int32), N)
    edge_index = jnp.stack([idx_i, idx_j])               # (2, 512)

    ref = mpnn_ref(params, node_embedding, node_pos, grid_pos, edge_index)

    # Default fused single-kernel path; edge_tile=128 forces a 4-tile
    # accumulation so init / accumulate / finalize phases are all exercised.
    out = mpnn_layer_forward(params, node_embedding, node_pos, grid_pos,
                             edge_index, edge_tile=128, num_splits=1)
    out = jax.block_until_ready(out)
    # bf16 MXU operands vs f32 reference -> slightly looser tolerance.
    np.testing.assert_allclose(np.asarray(out), np.asarray(ref),
                               rtol=2e-2, atol=2e-2)

    # Split path (partials + reduce kernel) used on multi-TC chips.
    out2 = mpnn_layer_forward(params, node_embedding, node_pos, grid_pos,
                              edge_index, edge_tile=128, num_splits=2)
    out2 = jax.block_until_ready(out2)
    np.testing.assert_allclose(np.asarray(out2), np.asarray(ref),
                               rtol=2e-2, atol=2e-2)

    print("KERNEL_OK")
</pallas_src>

<mosaic_0001>
module attributes {stable_mosaic.version = 11 : i64} {
  func.func @_mpnn_fused_kernel(%arg0: i32, %arg1: memref<128x2xi32, #tpu.memory_space<vmem>>, %arg2: memref<1x128xi32, #tpu.memory_space<vmem>>, %arg3: memref<16x256xbf16, #tpu.memory_space<vmem>>, %arg4: memref<32x128xbf16, #tpu.memory_space<vmem>>, %arg5: memref<128x128xbf16, #tpu.memory_space<vmem>>, %arg6: memref<128x128xbf16, #tpu.memory_space<vmem>>, %arg7: memref<128x128xbf16, #tpu.memory_space<vmem>>, %arg8: memref<128x128xbf16, #tpu.memory_space<vmem>>, %arg9: memref<8x128xf32, #tpu.memory_space<vmem>>, %arg10: memref<32x1xf32, #tpu.memory_space<vmem>>, %arg11: memref<32x128xf32, #tpu.memory_space<vmem>>, %arg12: memref<32x128xf32, #tpu.memory_space<vmem>>) attributes {dimension_semantics = [#tpu.dimension_semantics<arbitrary>], iteration_bounds = array<i64: 4>, scalar_prefetch = 0 : i64, scratch_operands = 1 : i64, tpu.core_type = #tpu.core_type<tc>, window_params = [{transform_indices = @transform_0, window_bounds = array<i64: 128, 2>}, {transform_indices = @transform_1, window_bounds = array<i64: 1, 128>}, {pipeline_mode = #tpu.pipeline_mode<synchronous>, transform_indices = @transform_2, window_bounds = array<i64: 16, 256>}, {pipeline_mode = #tpu.pipeline_mode<synchronous>, transform_indices = @transform_3, window_bounds = array<i64: 32, 128>}, {pipeline_mode = #tpu.pipeline_mode<synchronous>, transform_indices = @transform_4, window_bounds = array<i64: 128, 128>}, {pipeline_mode = #tpu.pipeline_mode<synchronous>, transform_indices = @transform_5, window_bounds = array<i64: 128, 128>}, {pipeline_mode = #tpu.pipeline_mode<synchronous>, transform_indices = @transform_6, window_bounds = array<i64: 128, 128>}, {pipeline_mode = #tpu.pipeline_mode<synchronous>, transform_indices = @transform_7, window_bounds = array<i64: 128, 128>}, {pipeline_mode = #tpu.pipeline_mode<synchronous>, transform_indices = @transform_8, window_bounds = array<i64: 8, 128>}, {pipeline_mode = #tpu.pipeline_mode<synchronous>, transform_indices = @transform_9, window_bounds = array<i64: 32, 1>}, {pipeline_mode = #tpu.pipeline_mode<synchronous>, transform_indices = @transform_10, window_bounds = array<i64: 32, 128>}]} {
    %c0_i32 = arith.constant 0 : i32
    %0 = arith.cmpi eq, %arg0, %c0_i32 : i32
    %1 = arith.extui %0 : i1 to i32
    %c0_i32_0 = arith.constant 0 : i32
    %2 = arith.cmpi ne, %1, %c0_i32_0 : i32
    scf.if %2 {
      %cst_25 = arith.constant 0.000000e+00 : f32
      %61 = vector.broadcast %cst_25 : f32 to vector<32x128xf32>
      %c0_26 = arith.constant 0 : index
      %c0_27 = arith.constant 0 : index
      %62 = vector.load %arg12[%c0_26, %c0_27] : memref<32x128xf32, #tpu.memory_space<vmem>>, vector<32x128xf32>
      tpu.vector_store %arg12[%c0_26, %c0_27], %61 {strides = array<i32>} : memref<32x128xf32, #tpu.memory_space<vmem>>, vector<32x128xf32>,
    } else {
    }
    %c0 = arith.constant 0 : index
    %c0_1 = arith.constant 0 : index
    %3 = vector.load %arg1[%c0, %c0_1] : memref<128x2xi32, #tpu.memory_space<vmem>>, vector<128x1xi32>
    %c0_2 = arith.constant 0 : index
    %c1 = arith.constant 1 : index
    %4 = vector.load %arg1[%c0_2, %c1] : memref<128x2xi32, #tpu.memory_space<vmem>>, vector<128x1xi32>
    %5 = tpu.iota {dimensions = array<i32: 1>} : vector<128x16xi32>
    %6 = vector.broadcast %3 : vector<128x1xi32> to vector<128x16xi32>
    %7 = arith.cmpi eq, %5, %6 : vector<128x16xi32>
    %8 = arith.extui %7 : vector<128x16xi1> to vector<128x16xi32>
    %9 = arith.sitofp %8 : vector<128x16xi32> to vector<128x16xf32>
    %10 = arith.truncf %9 : vector<128x16xf32> to vector<128x16xbf16>
    %11 = tpu.iota {dimensions = array<i32: 1>} : vector<128x32xi32>
    %12 = vector.broadcast %4 : vector<128x1xi32> to vector<128x32xi32>
    %13 = arith.cmpi eq, %11, %12 : vector<128x32xi32>
    %14 = arith.extui %13 : vector<128x32xi1> to vector<128x32xi32>
    %15 = arith.sitofp %14 : vector<128x32xi32> to vector<128x32xf32>
    %16 = arith.truncf %15 : vector<128x32xf32> to vector<128x32xbf16>
    %17 = tpu.iota {dimensions = array<i32: 0>} : vector<32x128xi32>
    %c0_3 = arith.constant 0 : index
    %c0_4 = arith.constant 0 : index
    %18 = vector.load %arg2[%c0_3, %c0_4] : memref<1x128xi32, #tpu.memory_space<vmem>>, vector<1x128xi32>
    %19 = vector.broadcast %18 : vector<1x128xi32> to vector<32x128xi32>
    %20 = arith.cmpi eq, %17, %19 : vector<32x128xi32>
    %21 = arith.extui %20 : vector<32x128xi1> to vector<32x128xi32>
    %22 = arith.sitofp %21 : vector<32x128xi32> to vector<32x128xf32>
    %23 = arith.truncf %22 : vector<32x128xf32> to vector<32x128xbf16>
    %c0_5 = arith.constant 0 : index
    %c0_6 = arith.constant 0 : index
    %24 = vector.load %arg9[%c0_5, %c0_6] : memref<8x128xf32, #tpu.memory_space<vmem>>, vector<1x128xf32>
    %c1_7 = arith.constant 1 : index
    %c0_8 = arith.constant 0 : index
    %25 = vector.load %arg9[%c1_7, %c0_8] : memref<8x128xf32, #tpu.memory_space<vmem>>, vector<1x128xf32>
    %c0_9 = arith.constant 0 : index
    %c0_10 = arith.constant 0 : index
    %26 = vector.load %arg3[%c0_9, %c0_10] : memref<16x256xbf16, #tpu.memory_space<vmem>>, vector<16x256xbf16>
    %cst = arith.constant dense<0.000000e+00> : vector<128x256xf32>
    %27 = tpu.matmul %10, %26, %cst {dimension_numbers = #tpu.dot_dimension_numbers<[1], [0], [0], [1], [0, 0, 1, 1], [], []>} : vector<128x16xbf16>, vector<16x256xbf16>, vector<128x256xf32> -> vector<128x256xf32>
    %28 = vector.extract_strided_slice %27 {offsets = [0, 0], sizes = [128, 128], strides = [1, 1]} : vector<128x256xf32> to vector<128x128xf32>
    %29 = vector.extract_strided_slice %27 {offsets = [0, 128], sizes = [128, 128], strides = [1, 1]} : vector<128x256xf32> to vector<128x128xf32>
    %c0_11 = arith.constant 0 : index
    %c0_12 = arith.constant 0 : index
    %30 = vector.load %arg4[%c0_11, %c0_12] : memref<32x128xbf16, #tpu.memory_space<vmem>>, vector<32x128xbf16>
    %cst_13 = arith.constant dense<0.000000e+00> : vector<128x128xf32>
    %31 = tpu.matmul %16, %30, %cst_13 {dimension_numbers = #tpu.dot_dimension_numbers<[1], [0], [0], [1], [0, 0, 1, 1], [], []>} : vector<128x32xbf16>, vector<32x128xbf16>, vector<128x128xf32> -> vector<128x128xf32>
    %32 = arith.addf %28, %31 : vector<128x128xf32>
    %33 = vector.broadcast %24 : vector<1x128xf32> to vector<128x128xf32>
    %34 = arith.addf %32, %33 : vector<128x128xf32>
    %35 = arith.negf %34 : vector<128x128xf32>
    %36 = math.exp %35 : vector<128x128xf32>
    %cst_14 = arith.constant 1.000000e+00 : f32
    %37 = vector.broadcast %cst_14 : f32 to vector<128x128xf32>
    %38 = arith.addf %37, %36 : vector<128x128xf32>
    %39 = arith.divf %37, %38 : vector<128x128xf32>
    %40 = arith.mulf %34, %39 : vector<128x128xf32>
    %41 = arith.truncf %40 : vector<128x128xf32> to vector<128x128xbf16>
    %c0_15 = arith.constant 0 : index
    %c0_16 = arith.constant 0 : index
    %42 = vector.load %arg5[%c0_15, %c0_16] : memref<128x128xbf16, #tpu.memory_space<vmem>>, vector<128x128xbf16>
    %cst_17 = arith.constant dense<0.000000e+00> : vector<128x128xf32>
    %43 = tpu.matmul %41, %42, %cst_17 {dimension_numbers = #tpu.dot_dimension_numbers<[1], [0], [0], [1], [0, 0, 1, 1], [], []>} : vector<128x128xbf16>, vector<128x128xbf16>, vector<128x128xf32> -> vector<128x128xf32>
    %44 = arith.addf %29, %43 : vector<128x128xf32>
    %45 = vector.broadcast %25 : vector<1x128xf32> to vector<128x128xf32>
    %46 = arith.addf %44, %45 : vector<128x128xf32>
    %c0_18 = arith.constant 0 : index
    %c0_19 = arith.constant 0 : index
    %47 = vector.load %arg12[%c0_18, %c0_19] : memref<32x128xf32, #tpu.memory_space<vmem>>, vector<32x128xf32>
    %48 = arith.negf %46 : vector<128x128xf32>
    %49 = math.exp %48 : vector<128x128xf32>
    %cst_20 = arith.constant 1.000000e+00 : f32
    %50 = vector.broadcast %cst_20 : f32 to vector<128x128xf32>
    %51 = arith.addf %50, %49 : vector<128x128xf32>
    %52 = arith.divf %50, %51 : vector<128x128xf32>
    %53 = arith.mulf %46, %52 : vector<128x128xf32>
    %54 = arith.truncf %53 : vector<128x128xf32> to vector<128x128xbf16>
    %cst_21 = arith.constant dense<0.000000e+00> : vector<32x128xf32>
    %55 = tpu.matmul %23, %54, %cst_21 {dimension_numbers = #tpu.dot_dimension_numbers<[1], [0], [0], [1], [0, 0, 1, 1], [], []>} : vector<32x128xbf16>, vector<128x128xbf16>, vector<32x128xf32> -> vector<32x128xf32>
    %56 = arith.addf %47, %55 : vector<32x128xf32>
    %c0_22 = arith.constant 0 : index
    %c0_23 = arith.constant 0 : index
    %57 = vector.load %arg12[%c0_22, %c0_23] : memref<32x128xf32, #tpu.memory_space<vmem>>, vector<32x128xf32>
    tpu.vector_store %arg12[%c0_22, %c0_23], %56 {strides = array<i32>} : memref<32x128xf32, #tpu.memory_space<vmem>>, vector<32x128xf32>,
    %c3_i32 = arith.constant 3 : i32
    %58 = arith.cmpi eq, %arg0, %c3_i32 : i32
    %59 = arith.extui %58 : i1 to i32
    %c0_i32_24 = arith.constant 0 : i32
    %60 = arith.cmpi ne, %59, %c0_i32_24 : i32
    scf.if %60 {
      %c0_25 = arith.constant 0 : index
      %c0_26 = arith.constant 0 : index
      %61 = vector.load %arg12[%c0_25, %c0_26] : memref<32x128xf32, #tpu.memory_space<vmem>>, vector<32x128xf32>
      %c0_27 = arith.constant 0 : index
      %c0_28 = arith.constant 0 : index
      %62 = vector.load %arg10[%c0_27, %c0_28] : memref<32x1xf32, #tpu.memory_space<vmem>>, vector<32x1xf32>
      %63 = vector.broadcast %62 : vector<32x1xf32> to vector<32x128xf32>
      %64 = arith.mulf %61, %63 : vector<32x128xf32>
      %c2 = arith.constant 2 : index
      %c0_29 = arith.constant 0 : index
      %65 = vector.load %arg9[%c2, %c0_29] : memref<8x128xf32, #tpu.memory_space<vmem>>, vector<1x128xf32>
      %c3 = arith.constant 3 : index
      %c0_30 = arith.constant 0 : index
      %66 = vector.load %arg9[%c3, %c0_30] : memref<8x128xf32, #tpu.memory_space<vmem>>, vector<1x128xf32>
      %c4 = arith.constant 4 : index
      %c0_31 = arith.constant 0 : index
      %67 = vector.load %arg9[%c4, %c0_31] : memref<8x128xf32, #tpu.memory_space<vmem>>, vector<1x128xf32>
      %68 = arith.truncf %64 : vector<32x128xf32> to vector<32x128xbf16>
      %c0_32 = arith.constant 0 : index
      %c0_33 = arith.constant 0 : index
      %69 = vector.load %arg6[%c0_32, %c0_33] : memref<128x128xbf16, #tpu.memory_space<vmem>>, vector<128x128xbf16>
      %cst_34 = arith.constant dense<0.000000e+00> : vector<32x128xf32>
      %70 = tpu.matmul %68, %69, %cst_34 {dimension_numbers = #tpu.dot_dimension_numbers<[1], [0], [0], [1], [0, 0, 1, 1], [], []>} : vector<32x128xbf16>, vector<128x128xbf16>, vector<32x128xf32> -> vector<32x128xf32>
      %71 = vector.broadcast %65 : vector<1x128xf32> to vector<32x128xf32>
      %72 = arith.addf %70, %71 : vector<32x128xf32>
      %73 = arith.negf %72 : vector<32x128xf32>
      %74 = math.exp %73 : vector<32x128xf32>
      %cst_35 = arith.constant 1.000000e+00 : f32
      %75 = vector.broadcast %cst_35 : f32 to vector<32x128xf32>
      %76 = arith.addf %75, %74 : vector<32x128xf32>
      %77 = arith.divf %75, %76 : vector<32x128xf32>
      %78 = arith.mulf %72, %77 : vector<32x128xf32>
      %79 = arith.truncf %78 : vector<32x128xf32> to vector<32x128xbf16>
      %c0_36 = arith.constant 0 : index
      %c0_37 = arith.constant 0 : index
      %80 = vector.load %arg7[%c0_36, %c0_37] : memref<128x128xbf16, #tpu.memory_space<vmem>>, vector<128x128xbf16>
      %cst_38 = arith.constant dense<0.000000e+00> : vector<32x128xf32>
      %81 = tpu.matmul %79, %80, %cst_38 {dimension_numbers = #tpu.dot_dimension_numbers<[1], [0], [0], [1], [0, 0, 1, 1], [], []>} : vector<32x128xbf16>, vector<128x128xbf16>, vector<32x128xf32> -> vector<32x128xf32>
      %82 = vector.broadcast %66 : vector<1x128xf32> to vector<32x128xf32>
      %83 = arith.addf %81, %82 : vector<32x128xf32>
      %84 = arith.negf %83 : vector<32x128xf32>
      %85 = math.exp %84 : vector<32x128xf32>
      %cst_39 = arith.constant 1.000000e+00 : f32
      %86 = vector.broadcast %cst_39 : f32 to vector<32x128xf32>
      %87 = arith.addf %86, %85 : vector<32x128xf32>
      %88 = arith.divf %86, %87 : vector<32x128xf32>
      %89 = arith.mulf %83, %88 : vector<32x128xf32>
      %90 = arith.truncf %89 : vector<32x128xf32> to vector<32x128xbf16>
      %c0_40 = arith.constant 0 : index
      %c0_41 = arith.constant 0 : index
      %91 = vector.load %arg8[%c0_40, %c0_41] : memref<128x128xbf16, #tpu.memory_space<vmem>>, vector<128x128xbf16>
      %cst_42 = arith.constant dense<0.000000e+00> : vector<32x128xf32>
      %92 = tpu.matmul %90, %91, %cst_42 {dimension_numbers = #tpu.dot_dimension_numbers<[1], [0], [0], [1], [0, 0, 1, 1], [], []>} : vector<32x128xbf16>, vector<128x128xbf16>, vector<32x128xf32> -> vector<32x128xf32>
      %93 = vector.broadcast %67 : vector<1x128xf32> to vector<32x128xf32>
      %94 = arith.addf %92, %93 : vector<32x128xf32>
      %c0_43 = arith.constant 0 : index
      %c0_44 = arith.constant 0 : index
      %95 = vector.load %arg11[%c0_43, %c0_44] : memref<32x128xf32, #tpu.memory_space<vmem>>, vector<32x128xf32>
      tpu.vector_store %arg11[%c0_43, %c0_44], %94 {strides = array<i32>} : memref<32x128xf32, #tpu.memory_space<vmem>>, vector<32x128xf32>,
    } else {
    }
    return
  }
  func.func @transform_0(%arg0: i32) -> (i32, i32) {
    %c0_i32 = arith.constant 0 : i32
    %c0_i32_0 = arith.constant 0 : i32
    return %arg0, %c0_i32 : i32, i32
  }
  func.func @transform_1(%arg0: i32) -> (i32, i32) {
    %c0_i32 = arith.constant 0 : i32
    %c0_i32_0 = arith.constant 0 : i32
    return %c0_i32, %arg0 : i32, i32
  }
  func.func @transform_2(%arg0: i32) -> (i32, i32) {
    %c0_i32 = arith.constant 0 : i32
    %c0_i32_0 = arith.constant 0 : i32
    %c0_i32_1 = arith.constant 0 : i32
    return %c0_i32, %c0_i32_0 : i32, i32
  }
  func.func @transform_3(%arg0: i32) -> (i32, i32) {
    %c0_i32 = arith.constant 0 : i32
    %c0_i32_0 = arith.constant 0 : i32
    %c0_i32_1 = arith.constant 0 : i32
    return %c0_i32, %c0_i32_0 : i32, i32
  }
  func.func @transform_4(%arg0: i32) -> (i32, i32) {
    %c0_i32 = arith.constant 0 : i32
    %c0_i32_0 = arith.constant 0 : i32
    %c0_i32_1 = arith.constant 0 : i32
    return %c0_i32, %c0_i32_0 : i32, i32
  }
  func.func @transform_5(%arg0: i32) -> (i32, i32) {
    %c0_i32 = arith.constant 0 : i32
    %c0_i32_0 = arith.constant 0 : i32
    %c0_i32_1 = arith.constant 0 : i32
    return %c0_i32, %c0_i32_0 : i32, i32
  }
  func.func @transform_6(%arg0: i32) -> (i32, i32) {
    %c0_i32 = arith.constant 0 : i32
    %c0_i32_0 = arith.constant 0 : i32
    %c0_i32_1 = arith.constant 0 : i32
    return %c0_i32, %c0_i32_0 : i32, i32
  }
  func.func @transform_7(%arg0: i32) -> (i32, i32) {
    %c0_i32 = arith.constant 0 : i32
    %c0_i32_0 = arith.constant 0 : i32
    %c0_i32_1 = arith.constant 0 : i32
    return %c0_i32, %c0_i32_0 : i32, i32
  }
  func.func @transform_8(%arg0: i32) -> (i32, i32) {
    %c0_i32 = arith.constant 0 : i32
    %c0_i32_0 = arith.constant 0 : i32
    %c0_i32_1 = arith.constant 0 : i32
    return %c0_i32, %c0_i32_0 : i32, i32
  }
  func.func @transform_9(%arg0: i32) -> (i32, i32) {
    %c0_i32 = arith.constant 0 : i32
    %c0_i32_0 = arith.constant 0 : i32
    %c0_i32_1 = arith.constant 0 : i32
    return %c0_i32, %c0_i32_0 : i32, i32
  }
  func.func @transform_10(%arg0: i32) -> (i32, i32) {
    %c0_i32 = arith.constant 0 : i32
    %c0_i32_0 = arith.constant 0 : i32
    %c0_i32_1 = arith.constant 0 : i32
    return %c0_i32, %c0_i32_0 : i32, i32
  }
}

</mosaic_0001>

<llo_original>
// kernel: tpu_custom_call.1
$region0: #{tpu_custom_call.1}
  #allocation0 [shape = 'u32[]', space=smem, size = 0x4, offset = 0x4, fixed_abs, tag = 'smem constant byte address 0x4 - core index']
  #allocation1 [shape = 'u32[144,128]{1,0:T(1,128)}', space=vmem, size = 0x12000, scoped, tag = 'internal scratch']
  #allocation2 [shape = 'f32[32,128]{1,0:T(8,128)}', space=vmem, size = 0x4000, scoped, tag = 'scratch operand']
  %s0 = inlined_call_operand.vmem [shape: s32[512,2], index: 0, kind: input, shape index: {}]
  %s1 = inlined_call_operand.vmem [shape: s32[1,512], index: 1, kind: input, shape index: {}]
  %s2 = inlined_call_operand.vmem [shape: bf16[16,256], index: 2, kind: input, shape index: {}]
  %s3 = inlined_call_operand.vmem [shape: bf16[32,128], index: 3, kind: input, shape index: {}]
  %s4 = inlined_call_operand.vmem [shape: bf16[128,128], index: 4, kind: input, shape index: {}]
  %s5 = inlined_call_operand.vmem [shape: bf16[128,128], index: 5, kind: input, shape index: {}]
  %s6 = inlined_call_operand.vmem [shape: bf16[128,128], index: 6, kind: input, shape index: {}]
  %s7 = inlined_call_operand.vmem [shape: bf16[128,128], index: 7, kind: input, shape index: {}]
  %s8 = inlined_call_operand.vmem [shape: f32[8,128], index: 8, kind: input, shape index: {}]
  %s9 = inlined_call_operand.vmem [shape: f32[32,1], index: 9, kind: input, shape index: {}]
  %s10 = inlined_call_operand.hbm [shape: f32[32,128], index: 10, kind: output, shape index: {}]
  %s11 = sld [smem:[#allocation0]]
  $region81: #{tpu_custom_call.1} parent=0
    _
  %s13 = ssub.s32 1, %s11
  %s14 = scalar_select 0, %s13, %s11
  $region1: #{tpu_custom_call.1} parent=0
    #allocation3 [shape = 'u8[16384]{0}', space=vmem, size = 0x4000, scoped, tag = 'output window, operand 0, single buffered']
    #allocation4 [shape = 's32[2]{0}', space=sflag, size = 0x8, scoped, tag = 'scoped memory for tpu_custom_call.1']
    %15 = vsyncpa [#allocation4], 0
    loop: start=0, step=1, limit=6
    $region2: #{tpu_custom_call.1} parent=1 // loop_pre_header
      _
    $region3: #{tpu_custom_call.1} parent=1 // loop_header
      %s17 = sphi 0, %s21
      %p18 = scmp.ge.s32.totalorder %s17, 6
      %s27 = sphi 0, %s29
      %s30 = sphi 0, %s27
      %s31 = sphi 0, %s30
      %s47 = sphi 0, %s31
      %s53 = sphi 0, %s55
      %s56 = sphi 0, %s53
      %s57 = sphi 0, %s56
      %s73 = sphi 0, %s57
      %s77 = sphi 0, %s77
      %s79 = sphi 0, %s77
      %s80 = sphi 0, %s79
      %s94 = sphi 0, %s80
      %s98 = sphi 0, %s98
      %s100 = sphi 0, %s98
      %s101 = sphi 0, %s100
      %s115 = sphi 0, %s101
      %s119 = sphi 0, %s119
      %s121 = sphi 0, %s119
      %s122 = sphi 0, %s121
      %s136 = sphi 0, %s122
      %s140 = sphi 0, %s140
      %s142 = sphi 0, %s140
      %s143 = sphi 0, %s142
      %s157 = sphi 0, %s143
      %s161 = sphi 0, %s161
      %s163 = sphi 0, %s161
      %s164 = sphi 0, %s163
      %s178 = sphi 0, %s164
      %s182 = sphi 0, %s182
      %s184 = sphi 0, %s182
      %s185 = sphi 0, %s184
      %s199 = sphi 0, %s185
      %s203 = sphi 0, %s203
      %s205 = sphi 0, %s203
      %s206 = sphi 0, %s205
      %s220 = sphi 0, %s206
      %s224 = sphi 0, %s224
      %s226 = sphi 0, %s224
      %s227 = sphi 0, %s226
      %s241 = sphi 0, %s227
      %s245 = sphi 0, %s245
      %s247 = sphi 0, %s245
      %s248 = sphi 0, %s247
      %s262 = sphi 0, %s248
    $region4: #{tpu_custom_call.1} parent=1 // loop_header_branch
      %20 = sbr.rel (%p18) target = $region8
    $region5: #{tpu_custom_call.1} parent=1 // loop_body
      %s22 = ssub.s32 %s17, 1
      %s23 = ssub.s32 %s17, 2
      %s24 = sadd.s32 %s17, 1
      %s25 = ssub.s32 %s17, %s24
      %p26 = scmp.eq.s32.totalorder %s25, 0
      %s28 = sadd.s32 %s27, 1
      %s29 = scalar_select %p26, %s27, %s28
      %p32 = pneg %p26
      %p33 = scmp.eq.s32.totalorder %s17, 3
      %p34 = por %p32, %p33
      %p35 = scmp.ne.s32.totalorder %s27, %s30
      %p36 = scmp.eq.s32.totalorder %s17, 0
      %p37 = por %p35, %p36
      %p38 = scmp.ne.s32.totalorder %s27, %s30
      %p39 = scmp.eq.s32.totalorder %s22, 3
      %p40 = por %p38, %p39
      %p41 = scmp.ne.s32.totalorder %s30, %s31
      %p42 = scmp.eq.s32.totalorder %s22, 0
      %p43 = por %p41, %p42
      %p44 = scmp.ne.s32.totalorder %s30, %s31
      %p45 = scmp.eq.s32.totalorder %s23, 3
      %p46 = por %p44, %p45
      %p48 = scmp.ne.s32.totalorder %s31, %s47
      %p49 = scmp.eq.s32.totalorder %s23, 0
      %p50 = por %p48, %p49
      %s51 = ssub.s32 %s17, %s24
      %p52 = scmp.eq.s32.totalorder %s51, 0
      %s54 = sadd.s32 %s53, 1
      %s55 = scalar_select %p52, %s53, %s54
      %p58 = pneg %p52
      %p59 = scmp.eq.s32.totalorder %s17, 3
      %p60 = por %p58, %p59
      %p61 = scmp.ne.s32.totalorder %s53, %s56
      %p62 = scmp.eq.s32.totalorder %s17, 0
      %p63 = por %p61, %p62
      %p64 = scmp.ne.s32.totalorder %s53, %s56
      %p65 = scmp.eq.s32.totalorder %s22, 3
      %p66 = por %p64, %p65
      %p67 = scmp.ne.s32.totalorder %s56, %s57
      %p68 = scmp.eq.s32.totalorder %s22, 0
      %p69 = por %p67, %p68
      %p70 = scmp.ne.s32.totalorder %s56, %s57
      %p71 = scmp.eq.s32.totalorder %s23, 3
      %p72 = por %p70, %p71
      %p74 = scmp.ne.s32.totalorder %s57, %s73
      %p75 = scmp.eq.s32.totalorder %s23, 0
      %p76 = por %p74, %p75
      %s78 = sadd.s32 %s77, 1
      %p81 = scmp.eq.s32.totalorder %s17, 3
      %p82 = scmp.ne.s32.totalorder %s77, %s79
      %p83 = scmp.eq.s32.totalorder %s17, 0
      %p84 = por %p82, %p83
      %p85 = scmp.ne.s32.totalorder %s77, %s79
      %p86 = scmp.eq.s32.totalorder %s22, 3
      %p87 = por %p85, %p86
      %p88 = scmp.ne.s32.totalorder %s79, %s80
      %p89 = scmp.eq.s32.totalorder %s22, 0
      %p90 = por %p88, %p89
      %p91 = scmp.ne.s32.totalorder %s79, %s80
      %p92 = scmp.eq.s32.totalorder %s23, 3
      %p93 = por %p91, %p92
      %p95 = scmp.ne.s32.totalorder %s80, %s94
      %p96 = scmp.eq.s32.totalorder %s23, 0
      %p97 = por %p95, %p96
      %s99 = sadd.s32 %s98, 1
      %p102 = scmp.eq.s32.totalorder %s17, 3
      %p103 = scmp.ne.s32.totalorder %s98, %s100
      %p104 = scmp.eq.s32.totalorder %s17, 0
      %p105 = por %p103, %p104
      %p106 = scmp.ne.s32.totalorder %s98, %s100
      %p107 = scmp.eq.s32.totalorder %s22, 3
      %p108 = por %p106, %p107
      %p109 = scmp.ne.s32.totalorder %s100, %s101
      %p110 = scmp.eq.s32.totalorder %s22, 0
      %p111 = por %p109, %p110
      %p112 = scmp.ne.s32.totalorder %s100, %s101
      %p113 = scmp.eq.s32.totalorder %s23, 3
      %p114 = por %p112, %p113
      %p116 = scmp.ne.s32.totalorder %s101, %s115
      %p117 = scmp.eq.s32.totalorder %s23, 0
      %p118 = por %p116, %p117
      %s120 = sadd.s32 %s119, 1
      %p123 = scmp.eq.s32.totalorder %s17, 3
      %p124 = scmp.ne.s32.totalorder %s119, %s121
      %p125 = scmp.eq.s32.totalorder %s17, 0
      %p126 = por %p124, %p125
      %p127 = scmp.ne.s32.totalorder %s119, %s121
      %p128 = scmp.eq.s32.totalorder %s22, 3
      %p129 = por %p127, %p128
      %p130 = scmp.ne.s32.totalorder %s121, %s122
      %p131 = scmp.eq.s32.totalorder %s22, 0
      %p132 = por %p130, %p131
      %p133 = scmp.ne.s32.totalorder %s121, %s122
      %p134 = scmp.eq.s32.totalorder %s23, 3
      %p135 = por %p133, %p134
      %p137 = scmp.ne.s32.totalorder %s122, %s136
      %p138 = scmp.eq.s32.totalorder %s23, 0
      %p139 = por %p137, %p138
      %s141 = sadd.s32 %s140, 1
      %p144 = scmp.eq.s32.totalorder %s17, 3
      %p145 = scmp.ne.s32.totalorder %s140, %s142
      %p146 = scmp.eq.s32.totalorder %s17, 0
      %p147 = por %p145, %p146
      %p148 = scmp.ne.s32.totalorder %s140, %s142
      %p149 = scmp.eq.s32.totalorder %s22, 3
      %p150 = por %p148, %p149
      %p151 = scmp.ne.s32.totalorder %s142, %s143
      %p152 = scmp.eq.s32.totalorder %s22, 0
      %p153 = por %p151, %p152
      %p154 = scmp.ne.s32.totalorder %s142, %s143
      %p155 = scmp.eq.s32.totalorder %s23, 3
      %p156 = por %p154, %p155
      %p158 = scmp.ne.s32.totalorder %s143, %s157
      %p159 = scmp.eq.s32.totalorder %s23, 0
      %p160 = por %p158, %p159
      %s162 = sadd.s32 %s161, 1
      %p165 = scmp.eq.s32.totalorder %s17, 3
      %p166 = scmp.ne.s32.totalorder %s161, %s163
      %p167 = scmp.eq.s32.totalorder %s17, 0
      %p168 = por %p166, %p167
      %p169 = scmp.ne.s32.totalorder %s161, %s163
      %p170 = scmp.eq.s32.totalorder %s22, 3
      %p171 = por %p169, %p170
      %p172 = scmp.ne.s32.totalorder %s163, %s164
      %p173 = scmp.eq.s32.totalorder %s22, 0
      %p174 = por %p172, %p173
      %p175 = scmp.ne.s32.totalorder %s163, %s164
      %p176 = scmp.eq.s32.totalorder %s23, 3
      %p177 = por %p175, %p176
      %p179 = scmp.ne.s32.totalorder %s164, %s178
      %p180 = scmp.eq.s32.totalorder %s23, 0
      %p181 = por %p179, %p180
      %s183 = sadd.s32 %s182, 1
      %p186 = scmp.eq.s32.totalorder %s17, 3
      %p187 = scmp.ne.s32.totalorder %s182, %s184
      %p188 = scmp.eq.s32.totalorder %s17, 0
      %p189 = por %p187, %p188
      %p190 = scmp.ne.s32.totalorder %s182, %s184
      %p191 = scmp.eq.s32.totalorder %s22, 3
      %p192 = por %p190, %p191
      %p193 = scmp.ne.s32.totalorder %s184, %s185
      %p194 = scmp.eq.s32.totalorder %s22, 0
      %p195 = por %p193, %p194
      %p196 = scmp.ne.s32.totalorder %s184, %s185
      %p197 = scmp.eq.s32.totalorder %s23, 3
      %p198 = por %p196, %p197
      %p200 = scmp.ne.s32.totalorder %s185, %s199
      %p201 = scmp.eq.s32.totalorder %s23, 0
      %p202 = por %p200, %p201
      %s204 = sadd.s32 %s203, 1
      %p207 = scmp.eq.s32.totalorder %s17, 3
      %p208 = scmp.ne.s32.totalorder %s203, %s205
      %p209 = scmp.eq.s32.totalorder %s17, 0
      %p210 = por %p208, %p209
      %p211 = scmp.ne.s32.totalorder %s203, %s205
      %p212 = scmp.eq.s32.totalorder %s22, 3
      %p213 = por %p211, %p212
      %p214 = scmp.ne.s32.totalorder %s205, %s206
      %p215 = scmp.eq.s32.totalorder %s22, 0
      %p216 = por %p214, %p215
      %p217 = scmp.ne.s32.totalorder %s205, %s206
      %p218 = scmp.eq.s32.totalorder %s23, 3
      %p219 = por %p217, %p218
      %p221 = scmp.ne.s32.totalorder %s206, %s220
      %p222 = scmp.eq.s32.totalorder %s23, 0
      %p223 = por %p221, %p222
      %s225 = sadd.s32 %s224, 1
      %p228 = scmp.eq.s32.totalorder %s17, 3
      %p229 = scmp.ne.s32.totalorder %s224, %s226
      %p230 = scmp.eq.s32.totalorder %s17, 0
      %p231 = por %p229, %p230
      %p232 = scmp.ne.s32.totalorder %s224, %s226
      %p233 = scmp.eq.s32.totalorder %s22, 3
      %p234 = por %p232, %p233
      %p235 = scmp.ne.s32.totalorder %s226, %s227
      %p236 = scmp.eq.s32.totalorder %s22, 0
      %p237 = por %p235, %p236
      %p238 = scmp.ne.s32.totalorder %s226, %s227
      %p239 = scmp.eq.s32.totalorder %s23, 3
      %p240 = por %p238, %p239
      %p242 = scmp.ne.s32.totalorder %s227, %s241
      %p243 = scmp.eq.s32.totalorder %s23, 0
      %p244 = por %p242, %p243
      %s246 = sadd.s32 %s245, 1
      %p249 = scmp.eq.s32.totalorder %s17, 3
      %p250 = scmp.ne.s32.totalorder %s245, %s247
      %p251 = scmp.eq.s32.totalorder %s17, 0
      %p252 = por %p250, %p251
      %p253 = scmp.ne.s32.totalorder %s245, %s247
      %p254 = scmp.eq.s32.totalorder %s22, 3
      %p255 = por %p253, %p254
      %p256 = scmp.ne.s32.totalorder %s247, %s248
      %p257 = scmp.eq.s32.totalorder %s22, 0
      %p258 = por %p256, %p257
      %p259 = scmp.ne.s32.totalorder %s247, %s248
      %p260 = scmp.eq.s32.totalorder %s23, 3
      %p261 = por %p259, %p260
      %p263 = scmp.ne.s32.totalorder %s248, %s262
      %p264 = scmp.eq.s32.totalorder %s23, 0
      %p265 = por %p263, %p264
      %p266 = scmp.le.s32.totalorder 1, %s17
      %p267 = scmp.lt.s32.totalorder %s17, 5
      %p268 = pnand %p266, %p267
      %p269 = pneg %p268
      // Predicated region
      $region9: #{tpu_custom_call.1} parent=5 // pred_check
        _
      $region10: #{tpu_custom_call.1} parent=5 // pred_check_branch
        %271 = sbr.rel (%p268) target = $region12
      $region11: #{tpu_custom_call.1} parent=5 // pred_region
        %s272 = ssub.s32 %s17, 1
        // Predicated region
        $region13: #{tpu_custom_call.1} parent=11 // pred_check
          %p273 = pneg %p90
        $region14: #{tpu_custom_call.1} parent=11 // pred_check_branch
          %275 = sbr.rel (%p273) target = $region16
        $region15: #{tpu_custom_call.1} parent=11 // pred_region
          _
        $region16: #{tpu_custom_call.1} parent=11 // pred_fallthru
          _
        // Predicated region
        $region17: #{tpu_custom_call.1} parent=11 // pred_check
          %p276 = pneg %p111
        $region18: #{tpu_custom_call.1} parent=11 // pred_check_branch
          %278 = sbr.rel (%p276) target = $region20
        $region19: #{tpu_custom_call.1} parent=11 // pred_region
          _
        $region20: #{tpu_custom_call.1} parent=11 // pred_fallthru
          _
        // Predicated region
        $region21: #{tpu_custom_call.1} parent=11 // pred_check
          %p279 = pneg %p132
        $region22: #{tpu_custom_call.1} parent=11 // pred_check_branch
          %281 = sbr.rel (%p279) target = $region24
        $region23: #{tpu_custom_call.1} parent=11 // pred_region
          _
        $region24: #{tpu_custom_call.1} parent=11 // pred_fallthru
          _
        // Predicated region
        $region25: #{tpu_custom_call.1} parent=11 // pred_check
          %p282 = pneg %p153
        $region26: #{tpu_custom_call.1} parent=11 // pred_check_branch
          %284 = sbr.rel (%p282) target = $region28
        $region27: #{tpu_custom_call.1} parent=11 // pred_region
          _
        $region28: #{tpu_custom_call.1} parent=11 // pred_fallthru
          _
        // Predicated region
        $region29: #{tpu_custom_call.1} parent=11 // pred_check
          %p285 = pneg %p174
        $region30: #{tpu_custom_call.1} parent=11 // pred_check_branch
          %287 = sbr.rel (%p285) target = $region32
        $region31: #{tpu_custom_call.1} parent=11 // pred_region
          _
        $region32: #{tpu_custom_call.1} parent=11 // pred_fallthru
          _
        // Predicated region
        $region33: #{tpu_custom_call.1} parent=11 // pred_check
          %p288 = pneg %p195
        $region34: #{tpu_custom_call.1} parent=11 // pred_check_branch
          %290 = sbr.rel (%p288) target = $region36
        $region35: #{tpu_custom_call.1} parent=11 // pred_region
          _
        $region36: #{tpu_custom_call.1} parent=11 // pred_fallthru
          _
        // Predicated region
        $region37: #{tpu_custom_call.1} parent=11 // pred_check
          %p291 = pneg %p216
        $region38: #{tpu_custom_call.1} parent=11 // pred_check_branch
          %293 = sbr.rel (%p291) target = $region40
        $region39: #{tpu_custom_call.1} parent=11 // pred_region
          _
        $region40: #{tpu_custom_call.1} parent=11 // pred_fallthru
          _
        // Predicated region
        $region41: #{tpu_custom_call.1} parent=11 // pred_check
          %p294 = pneg %p237
        $region42: #{tpu_custom_call.1} parent=11 // pred_check_branch
          %296 = sbr.rel (%p294) target = $region44
        $region43: #{tpu_custom_call.1} parent=11 // pred_region
          _
        $region44: #{tpu_custom_call.1} parent=11 // pred_fallthru
          _
      $region12: #{tpu_custom_call.1} parent=5 // pred_fallthru
        _
      %p297 = scmp.lt.s32.totalorder %s17, 4
      // Predicated region
      $region45: #{tpu_custom_call.1} parent=5 // pred_check
        %p298 = pneg %p297
      $region46: #{tpu_custom_call.1} parent=5 // pred_check_branch
        %300 = sbr.rel (%p298) target = $region48
      $region47: #{tpu_custom_call.1} parent=5 // pred_region
        // Predicated region
        $region49: #{tpu_custom_call.1} parent=47 // pred_check
          %p301 = pneg %p37
        $region50: #{tpu_custom_call.1} parent=47 // pred_check_branch
          %303 = sbr.rel (%p301) target = $region52
        $region51: #{tpu_custom_call.1} parent=47 // pred_region
          %s304 = smul.u32 16, %s17
          %p305 = scmp.lt.s32.totalorder %s304, 63
          %s306 = scalar_select %p305, %s304, 63
          %s307 = smul.addr %s306, 8
          %s308 = scalar_lea.vmem %s0, %s307
          %s309 = smul.u32 16, %s17
        $region52: #{tpu_custom_call.1} parent=47 // pred_fallthru
          _
        // Predicated region
        $region53: #{tpu_custom_call.1} parent=47 // pred_check
          %p310 = pneg %p63
        $region54: #{tpu_custom_call.1} parent=47 // pred_check_branch
          %312 = sbr.rel (%p310) target = $region56
        $region55: #{tpu_custom_call.1} parent=47 // pred_region
          %p313 = scmp.lt.s32.totalorder %s17, 3
          %s314 = scalar_select %p313, %s17, 3
          %s315 = scalar_lea.vmem %s1, %s314
        $region56: #{tpu_custom_call.1} parent=47 // pred_fallthru
          _
      $region48: #{tpu_custom_call.1} parent=5 // pred_fallthru
        _
      %p316 = scmp.le.s32.totalorder 1, %s17
      %p317 = scmp.lt.s32.totalorder %s17, 5
      %p318 = pnand %p316, %p317
      %p319 = pneg %p318
      // Predicated region
      $region57: #{tpu_custom_call.1} parent=5 // pred_check
        _
      $region58: #{tpu_custom_call.1} parent=5 // pred_check_branch
        %321 = sbr.rel (%p318) target = $region60
      $region59: #{tpu_custom_call.1} parent=5 // pred_region
        %s322 = ssub.s32 %s17, 1
        %s323 = smul.u32 16, %s22
        %p324 = scmp.lt.s32.totalorder %s323, 63
        %s325 = scalar_select %p324, %s323, 63
        %s326 = smul.addr %s325, 8
        %s327 = scalar_lea.vmem %s0, %s326
        %p328 = pneg %p43
        %p329 = pneg %p40
        %p330 = scmp.lt.s32.totalorder %s22, 3
        %s331 = scalar_select %p330, %s22, 3
        %s332 = scalar_lea.vmem %s1, %s331
        %p333 = pneg %p69
        %p334 = pneg %p66
        %p335 = pneg %p90
        %p336 = pneg %p87
        %p337 = pneg %p111
        %p338 = pneg %p108
        %p339 = pneg %p132
        %p340 = pneg %p129
        %p341 = pneg %p153
        %p342 = pneg %p150
        %p343 = pneg %p174
        %p344 = pneg %p171
        %p345 = pneg %p195
        %p346 = pneg %p192
        %p347 = pneg %p216
        %p348 = pneg %p213
        %p349 = pneg %p237
        %p350 = pneg %p234
        %p351 = pneg %p258
        %p352 = pneg %p255
        %s353 = smul.u32 16, %s22
        %p354 = scmp.lt.s32.totalorder %s353, 63
        %s355 = scalar_select %p354, %s353, 63
        %s356 = smul.addr %s355, 8
        %s357 = scalar_lea.vmem %s0, %s356
        %s358 = smul.u32 16, %s22
        %p359 = scmp.lt.s32.totalorder %s22, 3
        %s360 = scalar_select %p359, %s22, 3
        %s361 = scalar_lea.vmem %s1, %s360
        %p363 = scmp.eq.s32.totalorder %s22, 0
        // Predicated region
        $region61: #{tpu_custom_call.1} parent=59 // pred_check
          %p364 = pneg %p363
        $region62: #{tpu_custom_call.1} parent=59 // pred_check_branch
          %366 = sbr.rel (%p364) target = $region64
        $region63: #{tpu_custom_call.1} parent=59 // pred_region
          %367 = vst [vmem:[#allocation2] sm:$0xff] 0.0
          %368 = vst [vmem:[#allocation2 + $0x8] sm:$0xff] 0.0
          %369 = vst [vmem:[#allocation2 + $0x10] sm:$0xff] 0.0
          %370 = vst [vmem:[#allocation2 + $0x18] sm:$0xff] 0.0
        $region64: #{tpu_custom_call.1} parent=59 // pred_fallthru
          _
        %v371 = vld [vmem:[%s357] sm:$0xff]
        %v372 = vld [vmem:[%s357 + $0x8] sm:$0xff]
        %v373 = vld [vmem:[%s357 + $0x10] sm:$0xff]
        %v374 = vld [vmem:[%s357 + $0x18] sm:$0xff]
        %v375 = vld [vmem:[%s357 + $0x20] sm:$0xff]
        %v376 = vld [vmem:[%s357 + $0x28] sm:$0xff]
        %v377 = vld [vmem:[%s357 + $0x30] sm:$0xff]
        %v378 = vld [vmem:[%s357 + $0x38] sm:$0xff]
        %v379 = vld [vmem:[%s357 + $0x40] sm:$0xff]
        %v380 = vld [vmem:[%s357 + $0x48] sm:$0xff]
        %v381 = vld [vmem:[%s357 + $0x50] sm:$0xff]
        %v382 = vld [vmem:[%s357 + $0x58] sm:$0xff]
        %v383 = vld [vmem:[%s357 + $0x60] sm:$0xff]
        %v384 = vld [vmem:[%s357 + $0x68] sm:$0xff]
        %v385 = vld [vmem:[%s357 + $0x70] sm:$0xff]
        %v386 = vld [vmem:[%s357 + $0x78] sm:$0xff]
        %v387 = vlaneseq
        %v388 = vand.u32 %v387, 127
        %389 = vset.pattern.permute.xlu0 0
        %390 = vperm.xlu0 %389, %v371
        %v391 = vpop.permute.xlu0 %390
        %392 = vset.pattern.permute.xlu0 0
        %393 = vperm.xlu0 %392, %v372
        %v394 = vpop.permute.xlu0 %393
        %395 = vset.pattern.permute.xlu0 0
        %396 = vperm.xlu0 %395, %v373
        %v397 = vpop.permute.xlu0 %396
        %398 = vset.pattern.permute.xlu0 0
        %399 = vperm.xlu0 %398, %v374
        %v400 = vpop.permute.xlu0 %399
        %401 = vset.pattern.permute.xlu0 0
        %402 = vperm.xlu0 %401, %v375
        %v403 = vpop.permute.xlu0 %402
        %404 = vset.pattern.permute.xlu0 0
        %405 = vperm.xlu0 %404, %v376
        %v406 = vpop.permute.xlu0 %405
        %407 = vset.pattern.permute.xlu0 0
        %408 = vperm.xlu0 %407, %v377
        %v409 = vpop.permute.xlu0 %408
        %410 = vset.pattern.permute.xlu0 0
        %411 = vperm.xlu0 %410, %v378
        %v412 = vpop.permute.xlu0 %411
        %413 = vset.pattern.permute.xlu0 0
        %414 = vperm.xlu0 %413, %v379
        %v415 = vpop.permute.xlu0 %414
        %416 = vset.pattern.permute.xlu0 0
        %417 = vperm.xlu0 %416, %v380
        %v418 = vpop.permute.xlu0 %417
        %419 = vset.pattern.permute.xlu0 0
        %420 = vperm.xlu0 %419, %v381
        %v421 = vpop.permute.xlu0 %420
        %422 = vset.pattern.permute.xlu0 0
        %423 = vperm.xlu0 %422, %v382
        %v424 = vpop.permute.xlu0 %423
        %425 = vset.pattern.permute.xlu0 0
        %426 = vperm.xlu0 %425, %v383
        %v427 = vpop.permute.xlu0 %426
        %428 = vset.pattern.permute.xlu0 0
        %429 = vperm.xlu0 %428, %v384
        %v430 = vpop.permute.xlu0 %429
        %431 = vset.pattern.permute.xlu0 0
        %432 = vperm.xlu0 %431, %v385
        %v433 = vpop.permute.xlu0 %432
        %434 = vset.pattern.permute.xlu0 0
        %435 = vperm.xlu0 %434, %v386
        %v436 = vpop.permute.xlu0 %435
        %vm437 = vcmp.eq.s32.totalorder %v388, %v391
        %vm438 = vcmp.eq.s32.totalorder %v388, %v394
        %vm439 = vcmp.eq.s32.totalorder %v388, %v397
        %vm440 = vcmp.eq.s32.totalorder %v388, %v400
        %vm441 = vcmp.eq.s32.totalorder %v388, %v403
        %vm442 = vcmp.eq.s32.totalorder %v388, %v406
        %vm443 = vcmp.eq.s32.totalorder %v388, %v409
        %vm444 = vcmp.eq.s32.totalorder %v388, %v412
        %vm445 = vcmp.eq.s32.totalorder %v388, %v415
        %vm446 = vcmp.eq.s32.totalorder %v388, %v418
        %vm447 = vcmp.eq.s32.totalorder %v388, %v421
        %vm448 = vcmp.eq.s32.totalorder %v388, %v424
        %vm449 = vcmp.eq.s32.totalorder %v388, %v427
        %vm450 = vcmp.eq.s32.totalorder %v388, %v430
        %vm451 = vcmp.eq.s32.totalorder %v388, %v433
        %vm452 = vcmp.eq.s32.totalorder %v388, %v436
        %v453 = vsel %vm437, 1, 0
        %v454 = vsel %vm438, 1, 0
        %v455 = vsel %vm439, 1, 0
        %v456 = vsel %vm440, 1, 0
        %v457 = vsel %vm441, 1, 0
        %v458 = vsel %vm442, 1, 0
        %v459 = vsel %vm443, 1, 0
        %v460 = vsel %vm444, 1, 0
        %v461 = vsel %vm445, 1, 0
        %v462 = vsel %vm446, 1, 0
        %v463 = vsel %vm447, 1, 0
        %v464 = vsel %vm448, 1, 0
        %v465 = vsel %vm449, 1, 0
        %v466 = vsel %vm450, 1, 0
        %v467 = vsel %vm451, 1, 0
        %v468 = vsel %vm452, 1, 0
        %v469 = vcvt.s32.f32 %v453
        %v470 = vcvt.s32.f32 %v454
        %v471 = vcvt.s32.f32 %v455
        %v472 = vcvt.s32.f32 %v456
        %v473 = vcvt.s32.f32 %v457
        %v474 = vcvt.s32.f32 %v458
        %v475 = vcvt.s32.f32 %v459
        %v476 = vcvt.s32.f32 %v460
        %v477 = vcvt.s32.f32 %v461
        %v478 = vcvt.s32.f32 %v462
        %v479 = vcvt.s32.f32 %v463
        %v480 = vcvt.s32.f32 %v464
        %v481 = vcvt.s32.f32 %v465
        %v482 = vcvt.s32.f32 %v466
        %v483 = vcvt.s32.f32 %v467
        %v484 = vcvt.s32.f32 %v468
        %v485 = vpack.c.bf16 %v470, %v469
        %v486 = vpack.c.bf16 %v472, %v471
        %v487 = vpack.c.bf16 %v474, %v473
        %v488 = vpack.c.bf16 %v476, %v475
        %v489 = vpack.c.bf16 %v478, %v477
        %v490 = vpack.c.bf16 %v480, %v479
        %v491 = vpack.c.bf16 %v482, %v481
        %v492 = vpack.c.bf16 %v484, %v483
        %493 = vset.pattern.permute.xlu0 1
        %494 = vperm.xlu0 %493, %v371
        %v495 = vpop.permute.xlu0 %494
        %496 = vset.pattern.permute.xlu0 1
        %497 = vperm.xlu0 %496, %v372
        %v498 = vpop.permute.xlu0 %497
        %499 = vset.pattern.permute.xlu0 1
        %500 = vperm.xlu0 %499, %v373
        %v501 = vpop.permute.xlu0 %500
        %502 = vset.pattern.permute.xlu0 1
        %503 = vperm.xlu0 %502, %v374
        %v504 = vpop.permute.xlu0 %503
        %505 = vset.pattern.permute.xlu0 1
        %506 = vperm.xlu0 %505, %v375
        %v507 = vpop.permute.xlu0 %506
        %508 = vset.pattern.permute.xlu0 1
        %509 = vperm.xlu0 %508, %v376
        %v510 = vpop.permute.xlu0 %509
        %511 = vset.pattern.permute.xlu0 1
        %512 = vperm.xlu0 %511, %v377
        %v513 = vpop.permute.xlu0 %512
        %514 = vset.pattern.permute.xlu0 1
        %515 = vperm.xlu0 %514, %v378
        %v516 = vpop.permute.xlu0 %515
        %517 = vset.pattern.permute.xlu0 1
        %518 = vperm.xlu0 %517, %v379
        %v519 = vpop.permute.xlu0 %518
        %520 = vset.pattern.permute.xlu0 1
        %521 = vperm.xlu0 %520, %v380
        %v522 = vpop.permute.xlu0 %521
        %523 = vset.pattern.permute.xlu0 1
        %524 = vperm.xlu0 %523, %v381
        %v525 = vpop.permute.xlu0 %524
        %526 = vset.pattern.permute.xlu0 1
        %527 = vperm.xlu0 %526, %v382
        %v528 = vpop.permute.xlu0 %527
        %529 = vset.pattern.permute.xlu0 1
        %530 = vperm.xlu0 %529, %v383
        %v531 = vpop.permute.xlu0 %530
        %532 = vset.pattern.permute.xlu0 1
        %533 = vperm.xlu0 %532, %v384
        %v534 = vpop.permute.xlu0 %533
        %535 = vset.pattern.permute.xlu0 1
        %536 = vperm.xlu0 %535, %v385
        %v537 = vpop.permute.xlu0 %536
        %538 = vset.pattern.permute.xlu0 1
        %539 = vperm.xlu0 %538, %v386
        %v540 = vpop.permute.xlu0 %539
        %vm541 = vcmp.eq.s32.totalorder %v388, %v495
        %vm542 = vcmp.eq.s32.totalorder %v388, %v498
        %vm543 = vcmp.eq.s32.totalorder %v388, %v501
        %vm544 = vcmp.eq.s32.totalorder %v388, %v504
        %vm545 = vcmp.eq.s32.totalorder %v388, %v507
        %vm546 = vcmp.eq.s32.totalorder %v388, %v510
        %vm547 = vcmp.eq.s32.totalorder %v388, %v513
        %vm548 = vcmp.eq.s32.totalorder %v388, %v516
        %vm549 = vcmp.eq.s32.totalorder %v388, %v519
        %vm550 = vcmp.eq.s32.totalorder %v388, %v522
        %vm551 = vcmp.eq.s32.totalorder %v388, %v525
        %vm552 = vcmp.eq.s32.totalorder %v388, %v528
        %vm553 = vcmp.eq.s32.totalorder %v388, %v531
        %vm554 = vcmp.eq.s32.totalorder %v388, %v534
        %vm555 = vcmp.eq.s32.totalorder %v388, %v537
        %vm556 = vcmp.eq.s32.totalorder %v388, %v540
        %v557 = vsel %vm541, 1, 0
        %v558 = vsel %vm542, 1, 0
        %v559 = vsel %vm543, 1, 0
        %v560 = vsel %vm544, 1, 0
        %v561 = vsel %vm545, 1, 0
        %v562 = vsel %vm546, 1, 0
        %v563 = vsel %vm547, 1, 0
        %v564 = vsel %vm548, 1, 0
        %v565 = vsel %vm549, 1, 0
        %v566 = vsel %vm550, 1, 0
        %v567 = vsel %vm551, 1, 0
        %v568 = vsel %vm552, 1, 0
        %v569 = vsel %vm553, 1, 0
        %v570 = vsel %vm554, 1, 0
        %v571 = vsel %vm555, 1, 0
        %v572 = vsel %vm556, 1, 0
        %v573 = vcvt.s32.f32 %v557
        %v574 = vcvt.s32.f32 %v558
        %v575 = vcvt.s32.f32 %v559
        %v576 = vcvt.s32.f32 %v560
        %v577 = vcvt.s32.f32 %v561
        %v578 = vcvt.s32.f32 %v562
        %v579 = vcvt.s32.f32 %v563
        %v580 = vcvt.s32.f32 %v564
        %v581 = vcvt.s32.f32 %v565
        %v582 = vcvt.s32.f32 %v566
        %v583 = vcvt.s32.f32 %v567
        %v584 = vcvt.s32.f32 %v568
        %v585 = vcvt.s32.f32 %v569
        %v586 = vcvt.s32.f32 %v570
        %v587 = vcvt.s32.f32 %v571
        %v588 = vcvt.s32.f32 %v572
        %v589 = vpack.c.bf16 %v574, %v573
        %v590 = vpack.c.bf16 %v576, %v575
        %v591 = vpack.c.bf16 %v578, %v577
        %v592 = vpack.c.bf16 %v580, %v579
        %v593 = vpack.c.bf16 %v582, %v581
        %v594 = vpack.c.bf16 %v584, %v583
        %v595 = vpack.c.bf16 %v586, %v585
        %v596 = vpack.c.bf16 %v588, %v587
        %v597 = vlaneseq
        %v598 = vshrl.u32 %v597, 7
        %v599 = vadd.s32 %v598, 8
        %v600 = vadd.s32 %v598, 16
        %v601 = vadd.s32 %v598, 24
        %v602 = vld [vmem:[%s361] sm:$0x1]
        %v603 = vlaneseq
        %v604 = vshrl.u32 %v603, 7
        %v605 = vsub.s32 0, %v604
        %v606 = vrot.slane %v602, %v605
        %vm607 = vcmp.eq.s32.totalorder %v598, %v606
        %vm608 = vcmp.eq.s32.totalorder %v599, %v606
        %vm609 = vcmp.eq.s32.totalorder %v600, %v606
        %vm610 = vcmp.eq.s32.totalorder %v601, %v606
        %v611 = vsel %vm607, 1, 0
        %v612 = vsel %vm608, 1, 0
        %v613 = vsel %vm609, 1, 0
        %v614 = vsel %vm610, 1, 0
        %v615 = vcvt.s32.f32 %v611
        %v616 = vcvt.s32.f32 %v612
        %v617 = vcvt.s32.f32 %v613
        %v618 = vcvt.s32.f32 %v614
        %v619 = vpack.c.bf16 %v616, %v615
        %v620 = vpack.c.bf16 %v618, %v617
        %v621 = vld [vmem:[%s8] sm:$0x1]
        %v622 = vld [vmem:[%s8 + $0x1] sm:$0x1]
        %v623 = vld [vmem:[%s2] sm:$0xff]
        %v624 = vld [vmem:[%s2 + $0x8] sm:$0xff]
        %v627 = vunpack.c.l.b16 %v623
        %v628 = vunpack.c.h.b16 %v623
        %v629 = vunpack.c.l.b16 %v624
        %v630 = vunpack.c.h.b16 %v624
        %v631 = vpack.c.b16 %v629, %v627
        %v632 = vpack.c.b16 %v630, %v628
        %vm635 = vcmask 130048
        %v637 = vsel %vm635, %v485, 0
        %v640 = vsel %vm635, %v486, 0
        %v643 = vsel %vm635, %v487, 0
        %v646 = vsel %vm635, %v488, 0
        %v649 = vsel %vm635, %v489, 0
        %v652 = vsel %vm635, %v490, 0
        %v655 = vsel %vm635, %v491, 0
        %v658 = vsel %vm635, %v492, 0
        %660 = vmatprep.subr.bf16.mxu0 0
        %661 = vmatpush1.bf16.msra.mxu0 0
        %662 = vmatprep.subr.bf16.mxu0 0
        %663 = vmatpush1.bf16.msra.mxu0 0
        %664 = vmatprep.subr.bf16.mxu0 0
        %665 = vmatpush1.bf16.msra.mxu0 0
        %666 = vmatprep.subr.bf16.mxu0 0
        %667 = vmatpush1.bf16.msra.mxu0 0
        %668 = vmatprep.subr.bf16.mxu0 0
        %669 = vmatpush1.bf16.msra.mxu0 0
        %670 = vmatprep.subr.bf16.mxu0 0
        %671 = vmatpush1.bf16.msra.mxu0 0
        %672 = vmatprep.subr.bf16.mxu0 0
        %673 = vmatpush1.bf16.msra.mxu0 0
        %674 = vmatprep.subr.bf16.mxu0 %v632
        %675 = vmatpush1.bf16.msra.mxu0 %v631
        %676 = vmatprep.subr.bf16.mxu0 0
        %677 = vmatpush2.bf16.msra.mxu0 0
        %678 = vmatprep.subr.bf16.mxu0 0
        %679 = vmatpush2.bf16.msra.mxu0 0
        %680 = vmatprep.subr.bf16.mxu0 0
        %681 = vmatpush2.bf16.msra.mxu0 0
        %682 = vmatprep.subr.bf16.mxu0 0
        %683 = vmatpush2.bf16.msra.mxu0 0
        %684 = vmatprep.subr.bf16.mxu0 0
        %685 = vmatpush2.bf16.msra.mxu0 0
        %686 = vmatprep.subr.bf16.mxu0 0
        %687 = vmatpush2.bf16.msra.mxu0 0
        %688 = vmatprep.subr.bf16.mxu0 0
        %689 = vmatpush2.bf16.msra.mxu0 0
        %690 = vmatprep.subr.bf16.mxu0 0
        %691 = vmatpush2.bf16.msra.mxu0 0
        %692 = vmatprep.mubr.bf16.mxu0 0
        %693 = vmatmul.mubr.bf16.gmra.mxu0 %v637
        %v694 = vpop.f32.mrf.mxu0
        %v695 = vadd.f32 0.0, %v694
        %v696 = vpop.f32.mrf.mxu0
        %v697 = vadd.f32 0.0, %v696
        %v698 = vpop.f32.mrf.mxu0
        %v699 = vadd.f32 0.0, %v698
        %v700 = vpop.f32.mrf.mxu0
        %v701 = vadd.f32 0.0, %v700
        %702 = vmatprep.mubr.bf16.mxu0 0
        %703 = vmatmul.mubr.bf16.gmra.mxu0 %v640
        %v704 = vpop.f32.mrf.mxu0
        %v705 = vadd.f32 0.0, %v704
        %v706 = vpop.f32.mrf.mxu0
        %v707 = vadd.f32 0.0, %v706
        %v708 = vpop.f32.mrf.mxu0
        %v709 = vadd.f32 0.0, %v708
        %v710 = vpop.f32.mrf.mxu0
        %v711 = vadd.f32 0.0, %v710
        %712 = vmatprep.mubr.bf16.mxu0 0
        %713 = vmatmul.mubr.bf16.gmra.mxu0 %v643
        %v714 = vpop.f32.mrf.mxu0
        %v715 = vadd.f32 0.0, %v714
        %v716 = vpop.f32.mrf.mxu0
        %v717 = vadd.f32 0.0, %v716
        %v718 = vpop.f32.mrf.mxu0
        %v719 = vadd.f32 0.0, %v718
        %v720 = vpop.f32.mrf.mxu0
        %v721 = vadd.f32 0.0, %v720
        %722 = vmatprep.mubr.bf16.mxu0 0
        %723 = vmatmul.mubr.bf16.gmra.mxu0 %v646
        %v724 = vpop.f32.mrf.mxu0
        %v725 = vadd.f32 0.0, %v724
        %v726 = vpop.f32.mrf.mxu0
        %v727 = vadd.f32 0.0, %v726
        %v728 = vpop.f32.mrf.mxu0
        %v729 = vadd.f32 0.0, %v728
        %v730 = vpop.f32.mrf.mxu0
        %v731 = vadd.f32 0.0, %v730
        %732 = vmatprep.mubr.bf16.mxu0 0
        %733 = vmatmul.mubr.bf16.gmra.mxu0 %v649
        %v734 = vpop.f32.mrf.mxu0
        %v735 = vadd.f32 0.0, %v734
        %v736 = vpop.f32.mrf.mxu0
        %v737 = vadd.f32 0.0, %v736
        %v738 = vpop.f32.mrf.mxu0
        %v739 = vadd.f32 0.0, %v738
        %v740 = vpop.f32.mrf.mxu0
        %v741 = vadd.f32 0.0, %v740
        %742 = vmatprep.mubr.bf16.mxu0 0
        %743 = vmatmul.mubr.bf16.gmra.mxu0 %v652
        %v744 = vpop.f32.mrf.mxu0
        %v745 = vadd.f32 0.0, %v744
        %v746 = vpop.f32.mrf.mxu0
        %v747 = vadd.f32 0.0, %v746
        %v748 = vpop.f32.mrf.mxu0
        %v749 = vadd.f32 0.0, %v748
        %v750 = vpop.f32.mrf.mxu0
        %v751 = vadd.f32 0.0, %v750
        %752 = vmatprep.mubr.bf16.mxu0 0
        %753 = vmatmul.mubr.bf16.gmra.mxu0 %v655
        %v754 = vpop.f32.mrf.mxu0
        %v755 = vadd.f32 0.0, %v754
        %v756 = vpop.f32.mrf.mxu0
        %v757 = vadd.f32 0.0, %v756
        %v758 = vpop.f32.mrf.mxu0
        %v759 = vadd.f32 0.0, %v758
        %v760 = vpop.f32.mrf.mxu0
        %v761 = vadd.f32 0.0, %v760
        %762 = vmatprep.mubr.bf16.mxu0 0
        %763 = vmatmul.mubr.bf16.gmra.mxu0 %v658
        %v764 = vpop.f32.mrf.mxu0
        %v765 = vadd.f32 0.0, %v764
        %v766 = vpop.f32.mrf.mxu0
        %v767 = vadd.f32 0.0, %v766
        %v768 = vpop.f32.mrf.mxu0
        %v769 = vadd.f32 0.0, %v768
        %v770 = vpop.f32.mrf.mxu0
        %v771 = vadd.f32 0.0, %v770
        %772 = vdwg.mxu0
        %v773 = vld [vmem:[%s3] sm:$0xf]
        %v774 = vld [vmem:[%s3 + $0x4] sm:$0xf]
        %v775 = vld [vmem:[%s3 + $0x8] sm:$0xf]
        %v776 = vld [vmem:[%s3 + $0xc] sm:$0xf]
        %v781 = vunpack.c.l.b16 %v773
        %v782 = vunpack.c.l.b16 %v774
        %v783 = vunpack.c.l.b16 %v775
        %v784 = vunpack.c.l.b16 %v776
        %v785 = vpack.c.b16 %v782, %v781
        %v786 = vpack.c.b16 %v784, %v783
        %vm789 = vcmask 261120
        %v791 = vsel %vm789, %v589, 0
        %v794 = vsel %vm789, %v590, 0
        %v797 = vsel %vm789, %v591, 0
        %v800 = vsel %vm789, %v592, 0
        %v803 = vsel %vm789, %v593, 0
        %v806 = vsel %vm789, %v594, 0
        %v809 = vsel %vm789, %v595, 0
        %v812 = vsel %vm789, %v596, 0
        %814 = vmatprep.subr.bf16.mxu0 0
        %815 = vmatpush1.bf16.msra.mxu0 0
        %816 = vmatprep.subr.bf16.mxu0 0
        %817 = vmatpush1.bf16.msra.mxu0 0
        %818 = vmatprep.subr.bf16.mxu0 0
        %819 = vmatpush1.bf16.msra.mxu0 0
        %820 = vmatprep.subr.bf16.mxu0 0
        %821 = vmatpush1.bf16.msra.mxu0 0
        %822 = vmatprep.subr.bf16.mxu0 0
        %823 = vmatpush1.bf16.msra.mxu0 0
        %824 = vmatprep.subr.bf16.mxu0 0
        %825 = vmatpush1.bf16.msra.mxu0 0
        %826 = vmatprep.subr.bf16.mxu0 0
        %827 = vmatpush1.bf16.msra.mxu0 %v786
        %828 = vmatprep.subr.bf16.mxu0 0
        %829 = vmatpush1.bf16.msra.mxu0 %v785
        %830 = vmatprep.subr.bf16.mxu0 0
        %831 = vmatpush2.bf16.msra.mxu0 0
        %832 = vmatprep.subr.bf16.mxu0 0
        %833 = vmatpush2.bf16.msra.mxu0 0
        %834 = vmatprep.subr.bf16.mxu0 0
        %835 = vmatpush2.bf16.msra.mxu0 0
        %836 = vmatprep.subr.bf16.mxu0 0
        %837 = vmatpush2.bf16.msra.mxu0 0
        %838 = vmatprep.subr.bf16.mxu0 0
        %839 = vmatpush2.bf16.msra.mxu0 0
        %840 = vmatprep.subr.bf16.mxu0 0
        %841 = vmatpush2.bf16.msra.mxu0 0
        %842 = vmatprep.subr.bf16.mxu0 0
        %843 = vmatpush2.bf16.msra.mxu0 0
        %844 = vmatprep.subr.bf16.mxu0 0
        %845 = vmatpush2.bf16.msra.mxu0 0
        %846 = vmatprep.mubr.bf16.mxu0 0
        %847 = vmatmul.mubr.bf16.gmra.mxu0 %v791
        %v848 = vpop.f32.mrf.mxu0
        %v849 = vadd.f32 0.0, %v848
        %v850 = vpop.f32.mrf.mxu0
        %v851 = vpop.f32.mrf.mxu0
        %v852 = vadd.f32 0.0, %v851
        %v853 = vpop.f32.mrf.mxu0
        %854 = vmatprep.mubr.bf16.mxu0 0
        %855 = vmatmul.mubr.bf16.gmra.mxu0 %v794
        %v856 = vpop.f32.mrf.mxu0
        %v857 = vadd.f32 0.0, %v856
        %v858 = vpop.f32.mrf.mxu0
        %v859 = vpop.f32.mrf.mxu0
        %v860 = vadd.f32 0.0, %v859
        %v861 = vpop.f32.mrf.mxu0
        %862 = vmatprep.mubr.bf16.mxu0 0
        %863 = vmatmul.mubr.bf16.gmra.mxu0 %v797
        %v864 = vpop.f32.mrf.mxu0
        %v865 = vadd.f32 0.0, %v864
        %v866 = vpop.f32.mrf.mxu0
        %v867 = vpop.f32.mrf.mxu0
        %v868 = vadd.f32 0.0, %v867
        %v869 = vpop.f32.mrf.mxu0
        %870 = vmatprep.mubr.bf16.mxu0 0
        %871 = vmatmul.mubr.bf16.gmra.mxu0 %v800
        %v872 = vpop.f32.mrf.mxu0
        %v873 = vadd.f32 0.0, %v872
        %v874 = vpop.f32.mrf.mxu0
        %v875 = vpop.f32.mrf.mxu0
        %v876 = vadd.f32 0.0, %v875
        %v877 = vpop.f32.mrf.mxu0
        %878 = vmatprep.mubr.bf16.mxu0 0
        %879 = vmatmul.mubr.bf16.gmra.mxu0 %v803
        %v880 = vpop.f32.mrf.mxu0
        %v881 = vadd.f32 0.0, %v880
        %v882 = vpop.f32.mrf.mxu0
        %v883 = vpop.f32.mrf.mxu0
        %v884 = vadd.f32 0.0, %v883
        %v885 = vpop.f32.mrf.mxu0
        %886 = vmatprep.mubr.bf16.mxu0 0
        %887 = vmatmul.mubr.bf16.gmra.mxu0 %v806
        %v888 = vpop.f32.mrf.mxu0
        %v889 = vadd.f32 0.0, %v888
        %v890 = vpop.f32.mrf.mxu0
        %v891 = vpop.f32.mrf.mxu0
        %v892 = vadd.f32 0.0, %v891
        %v893 = vpop.f32.mrf.mxu0
        %894 = vmatprep.mubr.bf16.mxu0 0
        %895 = vmatmul.mubr.bf16.gmra.mxu0 %v809
        %v896 = vpop.f32.mrf.mxu0
        %v897 = vadd.f32 0.0, %v896
        %v898 = vpop.f32.mrf.mxu0
        %v899 = vpop.f32.mrf.mxu0
        %v900 = vadd.f32 0.0, %v899
        %v901 = vpop.f32.mrf.mxu0
        %902 = vmatprep.mubr.bf16.mxu0 0
        %903 = vmatmul.mubr.bf16.gmra.mxu0 %v812
        %v904 = vpop.f32.mrf.mxu0
        %v905 = vadd.f32 0.0, %v904
        %v906 = vpop.f32.mrf.mxu0
        %v907 = vpop.f32.mrf.mxu0
        %v908 = vadd.f32 0.0, %v907
        %v909 = vpop.f32.mrf.mxu0
        %910 = vdwg.mxu0
        %v911 = vadd.f32 %v695, %v849
        %v912 = vadd.f32 %v699, %v852
        %v913 = vadd.f32 %v705, %v857
        %v914 = vadd.f32 %v709, %v860
        %v915 = vadd.f32 %v715, %v865
        %v916 = vadd.f32 %v719, %v868
        %v917 = vadd.f32 %v725, %v873
        %v918 = vadd.f32 %v729, %v876
        %v919 = vadd.f32 %v735, %v881
        %v920 = vadd.f32 %v739, %v884
        %v921 = vadd.f32 %v745, %v889
        %v922 = vadd.f32 %v749, %v892
        %v923 = vadd.f32 %v755, %v897
        %v924 = vadd.f32 %v759, %v900
        %v925 = vadd.f32 %v765, %v905
        %v926 = vadd.f32 %v769, %v908
        %v927 = vlaneseq
        %v928 = vshrl.u32 %v927, 7
        %v929 = vsub.s32 0, %v928
        %v930 = vrot.slane %v621, %v929
        %v931 = vadd.f32 %v911, %v930
        %v932 = vadd.f32 %v912, %v930
        %v933 = vadd.f32 %v913, %v930
        %v934 = vadd.f32 %v914, %v930
        %v935 = vadd.f32 %v915, %v930
        %v936 = vadd.f32 %v916, %v930
        %v937 = vadd.f32 %v917, %v930
        %v938 = vadd.f32 %v918, %v930
        %v939 = vadd.f32 %v919, %v930
        %v940 = vadd.f32 %v920, %v930
        %v941 = vadd.f32 %v921, %v930
        %v942 = vadd.f32 %v922, %v930
        %v943 = vadd.f32 %v923, %v930
        %v944 = vadd.f32 %v924, %v930
        %v945 = vadd.f32 %v925, %v930
        %v946 = vadd.f32 %v926, %v930
        %v947 = vxor.u32 %v931, 2147483648
        %v948 = vxor.u32 %v932, 2147483648
        %v949 = vxor.u32 %v933, 2147483648
        %v950 = vxor.u32 %v934, 2147483648
        %v951 = vxor.u32 %v935, 2147483648
        %v952 = vxor.u32 %v936, 2147483648
        %v953 = vxor.u32 %v937, 2147483648
        %v954 = vxor.u32 %v938, 2147483648
        %v955 = vxor.u32 %v939, 2147483648
        %v956 = vxor.u32 %v940, 2147483648
        %v957 = vxor.u32 %v941, 2147483648
        %v958 = vxor.u32 %v942, 2147483648
        %v959 = vxor.u32 %v943, 2147483648
        %v960 = vxor.u32 %v944, 2147483648
        %v961 = vxor.u32 %v945, 2147483648
        %v962 = vxor.u32 %v946, 2147483648
        %v963 = vmul.f32 %v947, 1.442695
        %v964 = vpow.pop %v963
        %v965 = vmul.f32 %v948, 1.442695
        %v966 = vpow.pop %v965
        %v967 = vmul.f32 %v949, 1.442695
        %v968 = vpow.pop %v967
        %v969 = vmul.f32 %v950, 1.442695
        %v970 = vpow.pop %v969
        %v971 = vmul.f32 %v951, 1.442695
        %v972 = vpow.pop %v971
        %v973 = vmul.f32 %v952, 1.442695
        %v974 = vpow.pop %v973
        %v975 = vmul.f32 %v953, 1.442695
        %v976 = vpow.pop %v975
        %v977 = vmul.f32 %v954, 1.442695
        %v978 = vpow.pop %v977
        %v979 = vmul.f32 %v955, 1.442695
        %v980 = vpow.pop %v979
        %v981 = vmul.f32 %v956, 1.442695
        %v982 = vpow.pop %v981
        %v983 = vmul.f32 %v957, 1.442695
        %v984 = vpow.pop %v983
        %v985 = vmul.f32 %v958, 1.442695
        %v986 = vpow.pop %v985
        %v987 = vmul.f32 %v959, 1.442695
        %v988 = vpow.pop %v987
        %v989 = vmul.f32 %v960, 1.442695
        %v990 = vpow.pop %v989
        %v991 = vmul.f32 %v961, 1.442695
        %v992 = vpow.pop %v991
        %v993 = vmul.f32 %v962, 1.442695
        %v994 = vpow.pop %v993
        %v995 = vadd.f32 %v964, 1.0
        %v996 = vadd.f32 %v966, 1.0
        %v997 = vadd.f32 %v968, 1.0
        %v998 = vadd.f32 %v970, 1.0
        %v999 = vadd.f32 %v972, 1.0
        %v1000 = vadd.f32 %v974, 1.0
        %v1001 = vadd.f32 %v976, 1.0
        %v1002 = vadd.f32 %v978, 1.0
        %v1003 = vadd.f32 %v980, 1.0
        %v1004 = vadd.f32 %v982, 1.0
        %v1005 = vadd.f32 %v984, 1.0
        %v1006 = vadd.f32 %v986, 1.0
        %v1007 = vadd.f32 %v988, 1.0
        %v1008 = vadd.f32 %v990, 1.0
        %v1009 = vadd.f32 %v992, 1.0
        %v1010 = vadd.f32 %v994, 1.0
        %v1011 = vrcp.pop %v995
        %v1012 = vmul.f32 1.0, %v1011
        %v1013 = vrcp.pop %v996
        %v1014 = vmul.f32 1.0, %v1013
        %v1015 = vrcp.pop %v997
        %v1016 = vmul.f32 1.0, %v1015
        %v1017 = vrcp.pop %v998
        %v1018 = vmul.f32 1.0, %v1017
        %v1019 = vrcp.pop %v999
        %v1020 = vmul.f32 1.0, %v1019
        %v1021 = vrcp.pop %v1000
        %v1022 = vmul.f32 1.0, %v1021
        %v1023 = vrcp.pop %v1001
        %v1024 = vmul.f32 1.0, %v1023
        %v1025 = vrcp.pop %v1002
        %v1026 = vmul.f32 1.0, %v1025
        %v1027 = vrcp.pop %v1003
        %v1028 = vmul.f32 1.0, %v1027
        %v1029 = vrcp.pop %v1004
        %v1030 = vmul.f32 1.0, %v1029
        %v1031 = vrcp.pop %v1005
        %v1032 = vmul.f32 1.0, %v1031
        %v1033 = vrcp.pop %v1006
        %v1034 = vmul.f32 1.0, %v1033
        %v1035 = vrcp.pop %v1007
        %v1036 = vmul.f32 1.0, %v1035
        %v1037 = vrcp.pop %v1008
        %v1038 = vmul.f32 1.0, %v1037
        %v1039 = vrcp.pop %v1009
        %v1040 = vmul.f32 1.0, %v1039
        %v1041 = vrcp.pop %v1010
        %v1042 = vmul.f32 1.0, %v1041
        %v1043 = vmul.f32 %v931, %v1012
        %v1044 = vmul.f32 %v932, %v1014
        %v1045 = vmul.f32 %v933, %v1016
        %v1046 = vmul.f32 %v934, %v1018
        %v1047 = vmul.f32 %v935, %v1020
        %v1048 = vmul.f32 %v936, %v1022
        %v1049 = vmul.f32 %v937, %v1024
        %v1050 = vmul.f32 %v938, %v1026
        %v1051 = vmul.f32 %v939, %v1028
        %v1052 = vmul.f32 %v940, %v1030
        %v1053 = vmul.f32 %v941, %v1032
        %v1054 = vmul.f32 %v942, %v1034
        %v1055 = vmul.f32 %v943, %v1036
        %v1056 = vmul.f32 %v944, %v1038
        %v1057 = vmul.f32 %v945, %v1040
        %v1058 = vmul.f32 %v946, %v1042
        %v1059 = vpack.c.bf16 %v1044, %v1043
        %v1060 = vpack.c.bf16 %v1046, %v1045
        %v1061 = vpack.c.bf16 %v1048, %v1047
        %v1062 = vpack.c.bf16 %v1050, %v1049
        %v1063 = vpack.c.bf16 %v1052, %v1051
        %v1064 = vpack.c.bf16 %v1054, %v1053
        %v1065 = vpack.c.bf16 %v1056, %v1055
        %v1066 = vpack.c.bf16 %v1058, %v1057
        %v1067 = vld [vmem:[%s4] sm:$0xf]
        %v1068 = vld [vmem:[%s4 + $0x4] sm:$0xf]
        %v1069 = vld [vmem:[%s4 + $0x8] sm:$0xf]
        %v1070 = vld [vmem:[%s4 + $0xc] sm:$0xf]
        %v1071 = vld [vmem:[%s4 + $0x10] sm:$0xf]
        %v1072 = vld [vmem:[%s4 + $0x14] sm:$0xf]
        %v1073 = vld [vmem:[%s4 + $0x18] sm:$0xf]
        %v1074 = vld [vmem:[%s4 + $0x1c] sm:$0xf]
        %v1075 = vld [vmem:[%s4 + $0x20] sm:$0xf]
        %v1076 = vld [vmem:[%s4 + $0x24] sm:$0xf]
        %v1077 = vld [vmem:[%s4 + $0x28] sm:$0xf]
        %v1078 = vld [vmem:[%s4 + $0x2c] sm:$0xf]
        %v1079 = vld [vmem:[%s4 + $0x30] sm:$0xf]
        %v1080 = vld [vmem:[%s4 + $0x34] sm:$0xf]
        %v1081 = vld [vmem:[%s4 + $0x38] sm:$0xf]
        %v1082 = vld [vmem:[%s4 + $0x3c] sm:$0xf]
        %v1099 = vunpack.c.l.b16 %v1067
        %v1100 = vunpack.c.l.b16 %v1068
        %v1101 = vunpack.c.l.b16 %v1069
        %v1102 = vunpack.c.l.b16 %v1070
        %v1103 = vunpack.c.l.b16 %v1071
        %v1104 = vunpack.c.l.b16 %v1072
        %v1105 = vunpack.c.l.b16 %v1073
        %v1106 = vunpack.c.l.b16 %v1074
        %v1107 = vunpack.c.l.b16 %v1075
        %v1108 = vunpack.c.l.b16 %v1076
        %v1109 = vunpack.c.l.b16 %v1077
        %v1110 = vunpack.c.l.b16 %v1078
        %v1111 = vunpack.c.l.b16 %v1079
        %v1112 = vunpack.c.l.b16 %v1080
        %v1113 = vunpack.c.l.b16 %v1081
        %v1114 = vunpack.c.l.b16 %v1082
        %v1115 = vpack.c.b16 %v1100, %v1099
        %v1116 = vpack.c.b16 %v1102, %v1101
        %v1117 = vpack.c.b16 %v1104, %v1103
        %v1118 = vpack.c.b16 %v1106, %v1105
        %v1119 = vpack.c.b16 %v1108, %v1107
        %v1120 = vpack.c.b16 %v1110, %v1109
        %v1121 = vpack.c.b16 %v1112, %v1111
        %v1122 = vpack.c.b16 %v1114, %v1113
        %1131 = vmatprep.subr.bf16.mxu0 0
        %1132 = vmatpush1.bf16.msra.mxu0 %v1122
        %1133 = vmatprep.subr.bf16.mxu0 0
        %1134 = vmatpush1.bf16.msra.mxu0 %v1121
        %1135 = vmatprep.subr.bf16.mxu0 0
        %1136 = vmatpush1.bf16.msra.mxu0 %v1120
        %1137 = vmatprep.subr.bf16.mxu0 0
        %1138 = vmatpush1.bf16.msra.mxu0 %v1119
        %1139 = vmatprep.subr.bf16.mxu0 0
        %1140 = vmatpush1.bf16.msra.mxu0 %v1118
        %1141 = vmatprep.subr.bf16.mxu0 0
        %1142 = vmatpush1.bf16.msra.mxu0 %v1117
        %1143 = vmatprep.subr.bf16.mxu0 0
        %1144 = vmatpush1.bf16.msra.mxu0 %v1116
        %1145 = vmatprep.subr.bf16.mxu0 0
        %1146 = vmatpush1.bf16.msra.mxu0 %v1115
        %1147 = vmatprep.subr.bf16.mxu0 0
        %1148 = vmatpush2.bf16.msra.mxu0 0
        %1149 = vmatprep.subr.bf16.mxu0 0
        %1150 = vmatpush2.bf16.msra.mxu0 0
        %1151 = vmatprep.subr.bf16.mxu0 0
        %1152 = vmatpush2.bf16.msra.mxu0 0
        %1153 = vmatprep.subr.bf16.mxu0 0
        %1154 = vmatpush2.bf16.msra.mxu0 0
        %1155 = vmatprep.subr.bf16.mxu0 0
        %1156 = vmatpush2.bf16.msra.mxu0 0
        %1157 = vmatprep.subr.bf16.mxu0 0
        %1158 = vmatpush2.bf16.msra.mxu0 0
        %1159 = vmatprep.subr.bf16.mxu0 0
        %1160 = vmatpush2.bf16.msra.mxu0 0
        %1161 = vmatprep.subr.bf16.mxu0 0
        %1162 = vmatpush2.bf16.msra.mxu0 0
        %1163 = vmatprep.mubr.bf16.mxu0 0
        %1164 = vmatmul.mubr.bf16.gmra.mxu0 %v1059
        %v1165 = vpop.f32.mrf.mxu0
        %v1166 = vadd.f32 0.0, %v1165
        %v1167 = vpop.f32.mrf.mxu0
        %v1168 = vpop.f32.mrf.mxu0
        %v1169 = vadd.f32 0.0, %v1168
        %v1170 = vpop.f32.mrf.mxu0
        %1171 = vmatprep.mubr.bf16.mxu0 0
        %1172 = vmatmul.mubr.bf16.gmra.mxu0 %v1060
        %v1173 = vpop.f32.mrf.mxu0
        %v1174 = vadd.f32 0.0, %v1173
        %v1175 = vpop.f32.mrf.mxu0
        %v1176 = vpop.f32.mrf.mxu0
        %v1177 = vadd.f32 0.0, %v1176
        %v1178 = vpop.f32.mrf.mxu0
        %1179 = vmatprep.mubr.bf16.mxu0 0
        %1180 = vmatmul.mubr.bf16.gmra.mxu0 %v1061
        %v1181 = vpop.f32.mrf.mxu0
        %v1182 = vadd.f32 0.0, %v1181
        %v1183 = vpop.f32.mrf.mxu0
        %v1184 = vpop.f32.mrf.mxu0
        %v1185 = vadd.f32 0.0, %v1184
        %v1186 = vpop.f32.mrf.mxu0
        %1187 = vmatprep.mubr.bf16.mxu0 0
        %1188 = vmatmul.mubr.bf16.gmra.mxu0 %v1062
        %v1189 = vpop.f32.mrf.mxu0
        %v1190 = vadd.f32 0.0, %v1189
        %v1191 = vpop.f32.mrf.mxu0
        %v1192 = vpop.f32.mrf.mxu0
        %v1193 = vadd.f32 0.0, %v1192
        %v1194 = vpop.f32.mrf.mxu0
        %1195 = vmatprep.mubr.bf16.mxu0 0
        %1196 = vmatmul.mubr.bf16.gmra.mxu0 %v1063
        %v1197 = vpop.f32.mrf.mxu0
        %v1198 = vadd.f32 0.0, %v1197
        %v1199 = vpop.f32.mrf.mxu0
        %v1200 = vpop.f32.mrf.mxu0
        %v1201 = vadd.f32 0.0, %v1200
        %v1202 = vpop.f32.mrf.mxu0
        %1203 = vmatprep.mubr.bf16.mxu0 0
        %1204 = vmatmul.mubr.bf16.gmra.mxu0 %v1064
        %v1205 = vpop.f32.mrf.mxu0
        %v1206 = vadd.f32 0.0, %v1205
        %v1207 = vpop.f32.mrf.mxu0
        %v1208 = vpop.f32.mrf.mxu0
        %v1209 = vadd.f32 0.0, %v1208
        %v1210 = vpop.f32.mrf.mxu0
        %1211 = vmatprep.mubr.bf16.mxu0 0
        %1212 = vmatmul.mubr.bf16.gmra.mxu0 %v1065
        %v1213 = vpop.f32.mrf.mxu0
        %v1214 = vadd.f32 0.0, %v1213
        %v1215 = vpop.f32.mrf.mxu0
        %v1216 = vpop.f32.mrf.mxu0
        %v1217 = vadd.f32 0.0, %v1216
        %v1218 = vpop.f32.mrf.mxu0
        %1219 = vmatprep.mubr.bf16.mxu0 0
        %1220 = vmatmul.mubr.bf16.gmra.mxu0 %v1066
        %v1221 = vpop.f32.mrf.mxu0
        %v1222 = vadd.f32 0.0, %v1221
        %v1223 = vpop.f32.mrf.mxu0
        %v1224 = vpop.f32.mrf.mxu0
        %v1225 = vadd.f32 0.0, %v1224
        %v1226 = vpop.f32.mrf.mxu0
        %1227 = vdwg.mxu0
        %v1228 = vadd.f32 %v697, %v1166
        %v1229 = vadd.f32 %v701, %v1169
        %v1230 = vadd.f32 %v707, %v1174
        %v1231 = vadd.f32 %v711, %v1177
        %v1232 = vadd.f32 %v717, %v1182
        %v1233 = vadd.f32 %v721, %v1185
        %v1234 = vadd.f32 %v727, %v1190
        %v1235 = vadd.f32 %v731, %v1193
        %v1236 = vadd.f32 %v737, %v1198
        %v1237 = vadd.f32 %v741, %v1201
        %v1238 = vadd.f32 %v747, %v1206
        %v1239 = vadd.f32 %v751, %v1209
        %v1240 = vadd.f32 %v757, %v1214
        %v1241 = vadd.f32 %v761, %v1217
        %v1242 = vadd.f32 %v767, %v1222
        %v1243 = vadd.f32 %v771, %v1225
        %v1244 = vlaneseq
        %v1245 = vshrl.u32 %v1244, 7
        %v1246 = vsub.s32 0, %v1245
        %v1247 = vrot.slane %v622, %v1246
        %v1248 = vadd.f32 %v1228, %v1247
        %v1249 = vadd.f32 %v1229, %v1247
        %v1250 = vadd.f32 %v1230, %v1247
        %v1251 = vadd.f32 %v1231, %v1247
        %v1252 = vadd.f32 %v1232, %v1247
        %v1253 = vadd.f32 %v1233, %v1247
        %v1254 = vadd.f32 %v1234, %v1247
        %v1255 = vadd.f32 %v1235, %v1247
        %v1256 = vadd.f32 %v1236, %v1247
        %v1257 = vadd.f32 %v1237, %v1247
        %v1258 = vadd.f32 %v1238, %v1247
        %v1259 = vadd.f32 %v1239, %v1247
        %v1260 = vadd.f32 %v1240, %v1247
        %v1261 = vadd.f32 %v1241, %v1247
        %v1262 = vadd.f32 %v1242, %v1247
        %v1263 = vadd.f32 %v1243, %v1247
        %v1264 = vld [vmem:[#allocation2] sm:$0xff]
        %v1265 = vld [vmem:[#allocation2 + $0x8] sm:$0xff]
        %v1266 = vld [vmem:[#allocation2 + $0x10] sm:$0xff]
        %v1267 = vld [vmem:[#allocation2 + $0x18] sm:$0xff]
        %v1268 = vxor.u32 %v1248, 2147483648
        %v1269 = vxor.u32 %v1249, 2147483648
        %v1270 = vxor.u32 %v1250, 2147483648
        %v1271 = vxor.u32 %v1251, 2147483648
        %v1272 = vxor.u32 %v1252, 2147483648
        %v1273 = vxor.u32 %v1253, 2147483648
        %v1274 = vxor.u32 %v1254, 2147483648
        %v1275 = vxor.u32 %v1255, 2147483648
        %v1276 = vxor.u32 %v1256, 2147483648
        %v1277 = vxor.u32 %v1257, 2147483648
        %v1278 = vxor.u32 %v1258, 2147483648
        %v1279 = vxor.u32 %v1259, 2147483648
        %v1280 = vxor.u32 %v1260, 2147483648
        %v1281 = vxor.u32 %v1261, 2147483648
        %v1282 = vxor.u32 %v1262, 2147483648
        %v1283 = vxor.u32 %v1263, 2147483648
        %v1284 = vmul.f32 %v1268, 1.442695
        %v1285 = vpow.pop %v1284
        %v1286 = vmul.f32 %v1269, 1.442695
        %v1287 = vpow.pop %v1286
        %v1288 = vmul.f32 %v1270, 1.442695
        %v1289 = vpow.pop %v1288
        %v1290 = vmul.f32 %v1271, 1.442695
        %v1291 = vpow.pop %v1290
        %v1292 = vmul.f32 %v1272, 1.442695
        %v1293 = vpow.pop %v1292
        %v1294 = vmul.f32 %v1273, 1.442695
        %v1295 = vpow.pop %v1294
        %v1296 = vmul.f32 %v1274, 1.442695
        %v1297 = vpow.pop %v1296
        %v1298 = vmul.f32 %v1275, 1.442695
        %v1299 = vpow.pop %v1298
        %v1300 = vmul.f32 %v1276, 1.442695
        %v1301 = vpow.pop %v1300
        %v1302 = vmul.f32 %v1277, 1.442695
        %v1303 = vpow.pop %v1302
        %v1304 = vmul.f32 %v1278, 1.442695
        %v1305 = vpow.pop %v1304
        %v1306 = vmul.f32 %v1279, 1.442695
        %v1307 = vpow.pop %v1306
        %v1308 = vmul.f32 %v1280, 1.442695
        %v1309 = vpow.pop %v1308
        %v1310 = vmul.f32 %v1281, 1.442695
        %v1311 = vpow.pop %v1310
        %v1312 = vmul.f32 %v1282, 1.442695
        %v1313 = vpow.pop %v1312
        %v1314 = vmul.f32 %v1283, 1.442695
        %v1315 = vpow.pop %v1314
        %v1316 = vadd.f32 %v1285, 1.0
        %v1317 = vadd.f32 %v1287, 1.0
        %v1318 = vadd.f32 %v1289, 1.0
        %v1319 = vadd.f32 %v1291, 1.0
        %v1320 = vadd.f32 %v1293, 1.0
        %v1321 = vadd.f32 %v1295, 1.0
        %v1322 = vadd.f32 %v1297, 1.0
        %v1323 = vadd.f32 %v1299, 1.0
        %v1324 = vadd.f32 %v1301, 1.0
        %v1325 = vadd.f32 %v1303, 1.0
        %v1326 = vadd.f32 %v1305, 1.0
        %v1327 = vadd.f32 %v1307, 1.0
        %v1328 = vadd.f32 %v1309, 1.0
        %v1329 = vadd.f32 %v1311, 1.0
        %v1330 = vadd.f32 %v1313, 1.0
        %v1331 = vadd.f32 %v1315, 1.0
        %v1332 = vrcp.pop %v1316
        %v1333 = vmul.f32 1.0, %v1332
        %v1334 = vrcp.pop %v1317
        %v1335 = vmul.f32 1.0, %v1334
        %v1336 = vrcp.pop %v1318
        %v1337 = vmul.f32 1.0, %v1336
        %v1338 = vrcp.pop %v1319
        %v1339 = vmul.f32 1.0, %v1338
        %v1340 = vrcp.pop %v1320
        %v1341 = vmul.f32 1.0, %v1340
        %v1342 = vrcp.pop %v1321
        %v1343 = vmul.f32 1.0, %v1342
        %v1344 = vrcp.pop %v1322
        %v1345 = vmul.f32 1.0, %v1344
        %v1346 = vrcp.pop %v1323
        %v1347 = vmul.f32 1.0, %v1346
        %v1348 = vrcp.pop %v1324
        %v1349 = vmul.f32 1.0, %v1348
        %v1350 = vrcp.pop %v1325
        %v1351 = vmul.f32 1.0, %v1350
        %v1352 = vrcp.pop %v1326
        %v1353 = vmul.f32 1.0, %v1352
        %v1354 = vrcp.pop %v1327
        %v1355 = vmul.f32 1.0, %v1354
        %v1356 = vrcp.pop %v1328
        %v1357 = vmul.f32 1.0, %v1356
        %v1358 = vrcp.pop %v1329
        %v1359 = vmul.f32 1.0, %v1358
        %v1360 = vrcp.pop %v1330
        %v1361 = vmul.f32 1.0, %v1360
        %v1362 = vrcp.pop %v1331
        %v1363 = vmul.f32 1.0, %v1362
        %v1364 = vmul.f32 %v1248, %v1333
        %v1365 = vmul.f32 %v1249, %v1335
        %v1366 = vmul.f32 %v1250, %v1337
        %v1367 = vmul.f32 %v1251, %v1339
        %v1368 = vmul.f32 %v1252, %v1341
        %v1369 = vmul.f32 %v1253, %v1343
        %v1370 = vmul.f32 %v1254, %v1345
        %v1371 = vmul.f32 %v1255, %v1347
        %v1372 = vmul.f32 %v1256, %v1349
        %v1373 = vmul.f32 %v1257, %v1351
        %v1374 = vmul.f32 %v1258, %v1353
        %v1375 = vmul.f32 %v1259, %v1355
        %v1376 = vmul.f32 %v1260, %v1357
        %v1377 = vmul.f32 %v1261, %v1359
        %v1378 = vmul.f32 %v1262, %v1361
        %v1379 = vmul.f32 %v1263, %v1363
        %v1380 = vpack.c.bf16 %v1365, %v1364
        %v1381 = vpack.c.bf16 %v1367, %v1366
        %v1382 = vpack.c.bf16 %v1369, %v1368
        %v1383 = vpack.c.bf16 %v1371, %v1370
        %v1384 = vpack.c.bf16 %v1373, %v1372
        %v1385 = vpack.c.bf16 %v1375, %v1374
        %v1386 = vpack.c.bf16 %v1377, %v1376
        %v1387 = vpack.c.bf16 %v1379, %v1378
        %1388 = vmatprep.subr.bf16.mxu0 0
        %1389 = vmatpush1.bf16.msra.mxu0 %v1387
        %1390 = vmatprep.subr.bf16.mxu0 0
        %1391 = vmatpush1.bf16.msra.mxu0 %v1386
        %1392 = vmatprep.subr.bf16.mxu0 0
        %1393 = vmatpush1.bf16.msra.mxu0 %v1385
        %1394 = vmatprep.subr.bf16.mxu0 0
        %1395 = vmatpush1.bf16.msra.mxu0 %v1384
        %1396 = vmatprep.subr.bf16.mxu0 0
        %1397 = vmatpush1.bf16.msra.mxu0 %v1383
        %1398 = vmatprep.subr.bf16.mxu0 0
        %1399 = vmatpush1.bf16.msra.mxu0 %v1382
        %1400 = vmatprep.subr.bf16.mxu0 0
        %1401 = vmatpush1.bf16.msra.mxu0 %v1381
        %1402 = vmatprep.subr.bf16.mxu0 0
        %1403 = vmatpush1.bf16.msra.mxu0 %v1380
        %1404 = vmatprep.subr.bf16.mxu0 0
        %1405 = vmatpush2.bf16.msra.mxu0 0
        %1406 = vmatprep.subr.bf16.mxu0 0
        %1407 = vmatpush2.bf16.msra.mxu0 0
        %1408 = vmatprep.subr.bf16.mxu0 0
        %1409 = vmatpush2.bf16.msra.mxu0 0
        %1410 = vmatprep.subr.bf16.mxu0 0
        %1411 = vmatpush2.bf16.msra.mxu0 0
        %1412 = vmatprep.subr.bf16.mxu0 0
        %1413 = vmatpush2.bf16.msra.mxu0 0
        %1414 = vmatprep.subr.bf16.mxu0 0
        %1415 = vmatpush2.bf16.msra.mxu0 0
        %1416 = vmatprep.subr.bf16.mxu0 0
        %1417 = vmatpush2.bf16.msra.mxu0 0
        %1418 = vmatprep.subr.bf16.mxu0 0
        %1419 = vmatpush2.bf16.msra.mxu0 0
        %1420 = vmatprep.mubr.bf16.mxu0 0
        %1421 = vmatmul.mubr.bf16.gmra.mxu0 %v619
        %v1422 = vpop.f32.mrf.mxu0
        %v1423 = vadd.f32 0.0, %v1422
        %v1424 = vpop.f32.mrf.mxu0
        %v1425 = vpop.f32.mrf.mxu0
        %v1426 = vadd.f32 0.0, %v1425
        %v1427 = vpop.f32.mrf.mxu0
        %1428 = vmatprep.mubr.bf16.mxu0 0
        %1429 = vmatmul.mubr.bf16.gmra.mxu0 %v620
        %v1430 = vpop.f32.mrf.mxu0
        %v1431 = vadd.f32 0.0, %v1430
        %v1432 = vpop.f32.mrf.mxu0
        %v1433 = vpop.f32.mrf.mxu0
        %v1434 = vadd.f32 0.0, %v1433
        %v1435 = vpop.f32.mrf.mxu0
        %1436 = vdwg.mxu0
        %v1437 = vadd.f32 %v1264, %v1423
        %v1438 = vadd.f32 %v1265, %v1426
        %v1439 = vadd.f32 %v1266, %v1431
        %v1440 = vadd.f32 %v1267, %v1434
        %1441 = vst [vmem:[#allocation2] sm:$0xff] %v1437
        %1442 = vst [vmem:[#allocation2 + $0x8] sm:$0xff] %v1438
        %1443 = vst [vmem:[#allocation2 + $0x10] sm:$0xff] %v1439
        %1444 = vst [vmem:[#allocation2 + $0x18] sm:$0xff] %v1440
        %p1445 = scmp.eq.s32.totalorder %s22, 3
        // Predicated region
        $region65: #{tpu_custom_call.1} parent=59 // pred_check
          %p1446 = pneg %p1445
        $region66: #{tpu_custom_call.1} parent=59 // pred_check_branch
          %1448 = sbr.rel (%p1446) target = $region68
        $region67: #{tpu_custom_call.1} parent=59 // pred_region
          %v1449 = vld [vmem:[#allocation2] sm:$0xff]
          %v1450 = vld [vmem:[#allocation2 + $0x8] sm:$0xff]
          %v1451 = vld [vmem:[#allocation2 + $0x10] sm:$0xff]
          %v1452 = vld [vmem:[#allocation2 + $0x18] sm:$0xff]
          %v1453 = vld [vmem:[%s9] sm:$0xff]
          %v1454 = vld [vmem:[%s9 + $0x8] sm:$0xff]
          %v1455 = vld [vmem:[%s9 + $0x10] sm:$0xff]
          %v1456 = vld [vmem:[%s9 + $0x18] sm:$0xff]
          %1458 = vset.pattern.permute.xlu0 0
          %1459 = vperm.xlu0 %1458, %v1453
          %v1460 = vpop.permute.xlu0 %1459
          %1463 = vset.pattern.permute.xlu0 0
          %1464 = vperm.xlu0 %1463, %v1454
          %v1465 = vpop.permute.xlu0 %1464
          %1468 = vset.pattern.permute.xlu0 0
          %1469 = vperm.xlu0 %1468, %v1455
          %v1470 = vpop.permute.xlu0 %1469
          %1473 = vset.pattern.permute.xlu0 0
          %1474 = vperm.xlu0 %1473, %v1456
          %v1475 = vpop.permute.xlu0 %1474
          %v1477 = vmul.f32 %v1449, %v1460
          %v1478 = vmul.f32 %v1450, %v1465
          %v1479 = vmul.f32 %v1451, %v1470
          %v1480 = vmul.f32 %v1452, %v1475
          %v1481 = vld [vmem:[%s8 + $0x2] sm:$0x1]
          %v1482 = vld [vmem:[%s8 + $0x3] sm:$0x1]
          %v1483 = vld [vmem:[%s8 + $0x4] sm:$0x1]
          %v1484 = vpack.c.bf16 %v1478, %v1477
          %v1485 = vpack.c.bf16 %v1480, %v1479
          %v1486 = vld [vmem:[%s5] sm:$0xf]
          %v1487 = vld [vmem:[%s5 + $0x4] sm:$0xf]
          %v1488 = vld [vmem:[%s5 + $0x8] sm:$0xf]
          %v1489 = vld [vmem:[%s5 + $0xc] sm:$0xf]
          %v1490 = vld [vmem:[%s5 + $0x10] sm:$0xf]
          %v1491 = vld [vmem:[%s5 + $0x14] sm:$0xf]
          %v1492 = vld [vmem:[%s5 + $0x18] sm:$0xf]
          %v1493 = vld [vmem:[%s5 + $0x1c] sm:$0xf]
          %v1494 = vld [vmem:[%s5 + $0x20] sm:$0xf]
          %v1495 = vld [vmem:[%s5 + $0x24] sm:$0xf]
          %v1496 = vld [vmem:[%s5 + $0x28] sm:$0xf]
          %v1497 = vld [vmem:[%s5 + $0x2c] sm:$0xf]
          %v1498 = vld [vmem:[%s5 + $0x30] sm:$0xf]
          %v1499 = vld [vmem:[%s5 + $0x34] sm:$0xf]
          %v1500 = vld [vmem:[%s5 + $0x38] sm:$0xf]
          %v1501 = vld [vmem:[%s5 + $0x3c] sm:$0xf]
          %v1502 = vlaneseq
          %v1503 = vshrl.u32 %v1502, 7
          %v1504 = vsub.s32 0, %v1503
          %v1505 = vrot.slane %v1481, %v1504
          %v1522 = vunpack.c.l.b16 %v1486
          %v1523 = vunpack.c.l.b16 %v1487
          %v1524 = vunpack.c.l.b16 %v1488
          %v1525 = vunpack.c.l.b16 %v1489
          %v1526 = vunpack.c.l.b16 %v1490
          %v1527 = vunpack.c.l.b16 %v1491
          %v1528 = vunpack.c.l.b16 %v1492
          %v1529 = vunpack.c.l.b16 %v1493
          %v1530 = vunpack.c.l.b16 %v1494
          %v1531 = vunpack.c.l.b16 %v1495
          %v1532 = vunpack.c.l.b16 %v1496
          %v1533 = vunpack.c.l.b16 %v1497
          %v1534 = vunpack.c.l.b16 %v1498
          %v1535 = vunpack.c.l.b16 %v1499
          %v1536 = vunpack.c.l.b16 %v1500
          %v1537 = vunpack.c.l.b16 %v1501
          %v1538 = vpack.c.b16 %v1523, %v1522
          %v1539 = vpack.c.b16 %v1525, %v1524
          %v1540 = vpack.c.b16 %v1527, %v1526
          %v1541 = vpack.c.b16 %v1529, %v1528
          %v1542 = vpack.c.b16 %v1531, %v1530
          %v1543 = vpack.c.b16 %v1533, %v1532
          %v1544 = vpack.c.b16 %v1535, %v1534
          %v1545 = vpack.c.b16 %v1537, %v1536
          %1554 = vmatprep.subr.bf16.mxu0 0
          %1555 = vmatpush1.bf16.msra.mxu0 %v1545
          %1556 = vmatprep.subr.bf16.mxu0 0
          %1557 = vmatpush1.bf16.msra.mxu0 %v1544
          %1558 = vmatprep.subr.bf16.mxu0 0
          %1559 = vmatpush1.bf16.msra.mxu0 %v1543
          %1560 = vmatprep.subr.bf16.mxu0 0
          %1561 = vmatpush1.bf16.msra.mxu0 %v1542
          %1562 = vmatprep.subr.bf16.mxu0 0
          %1563 = vmatpush1.bf16.msra.mxu0 %v1541
          %1564 = vmatprep.subr.bf16.mxu0 0
          %1565 = vmatpush1.bf16.msra.mxu0 %v1540
          %1566 = vmatprep.subr.bf16.mxu0 0
          %1567 = vmatpush1.bf16.msra.mxu0 %v1539
          %1568 = vmatprep.subr.bf16.mxu0 0
          %1569 = vmatpush1.bf16.msra.mxu0 %v1538
          %1570 = vmatprep.subr.bf16.mxu0 0
          %1571 = vmatpush2.bf16.msra.mxu0 0
          %1572 = vmatprep.subr.bf16.mxu0 0
          %1573 = vmatpush2.bf16.msra.mxu0 0
          %1574 = vmatprep.subr.bf16.mxu0 0
          %1575 = vmatpush2.bf16.msra.mxu0 0
          %1576 = vmatprep.subr.bf16.mxu0 0
          %1577 = vmatpush2.bf16.msra.mxu0 0
          %1578 = vmatprep.subr.bf16.mxu0 0
          %1579 = vmatpush2.bf16.msra.mxu0 0
          %1580 = vmatprep.subr.bf16.mxu0 0
          %1581 = vmatpush2.bf16.msra.mxu0 0
          %1582 = vmatprep.subr.bf16.mxu0 0
          %1583 = vmatpush2.bf16.msra.mxu0 0
          %1584 = vmatprep.subr.bf16.mxu0 0
          %1585 = vmatpush2.bf16.msra.mxu0 0
          %1586 = vmatprep.mubr.bf16.mxu0 0
          %1587 = vmatmul.mubr.bf16.gmra.mxu0 %v1484
          %v1588 = vpop.f32.mrf.mxu0
          %v1589 = vadd.f32 %v1505, %v1588
          %v1590 = vpop.f32.mrf.mxu0
          %v1591 = vpop.f32.mrf.mxu0
          %v1592 = vadd.f32 %v1505, %v1591
          %v1593 = vpop.f32.mrf.mxu0
          %1594 = vmatprep.mubr.bf16.mxu0 0
          %1595 = vmatmul.mubr.bf16.gmra.mxu0 %v1485
          %v1596 = vpop.f32.mrf.mxu0
          %v1597 = vadd.f32 %v1505, %v1596
          %v1598 = vpop.f32.mrf.mxu0
          %v1599 = vpop.f32.mrf.mxu0
          %v1600 = vadd.f32 %v1505, %v1599
          %v1601 = vpop.f32.mrf.mxu0
          %1602 = vdwg.mxu0
          %v1603 = vxor.u32 %v1589, 2147483648
          %v1604 = vxor.u32 %v1592, 2147483648
          %v1605 = vxor.u32 %v1597, 2147483648
          %v1606 = vxor.u32 %v1600, 2147483648
          %v1607 = vmul.f32 %v1603, 1.442695
          %v1608 = vpow.pop %v1607
          %v1609 = vmul.f32 %v1604, 1.442695
          %v1610 = vpow.pop %v1609
          %v1611 = vmul.f32 %v1605, 1.442695
          %v1612 = vpow.pop %v1611
          %v1613 = vmul.f32 %v1606, 1.442695
          %v1614 = vpow.pop %v1613
          %v1615 = vadd.f32 %v1608, 1.0
          %v1616 = vadd.f32 %v1610, 1.0
          %v1617 = vadd.f32 %v1612, 1.0
          %v1618 = vadd.f32 %v1614, 1.0
          %v1619 = vrcp.pop %v1615
          %v1620 = vmul.f32 1.0, %v1619
          %v1621 = vrcp.pop %v1616
          %v1622 = vmul.f32 1.0, %v1621
          %v1623 = vrcp.pop %v1617
          %v1624 = vmul.f32 1.0, %v1623
          %v1625 = vrcp.pop %v1618
          %v1626 = vmul.f32 1.0, %v1625
          %v1627 = vmul.f32 %v1589, %v1620
          %v1628 = vmul.f32 %v1592, %v1622
          %v1629 = vmul.f32 %v1597, %v1624
          %v1630 = vmul.f32 %v1600, %v1626
          %v1631 = vpack.c.bf16 %v1628, %v1627
          %v1632 = vpack.c.bf16 %v1630, %v1629
          %v1633 = vld [vmem:[%s6] sm:$0xf]
          %v1634 = vld [vmem:[%s6 + $0x4] sm:$0xf]
          %v1635 = vld [vmem:[%s6 + $0x8] sm:$0xf]
          %v1636 = vld [vmem:[%s6 + $0xc] sm:$0xf]
          %v1637 = vld [vmem:[%s6 + $0x10] sm:$0xf]
          %v1638 = vld [vmem:[%s6 + $0x14] sm:$0xf]
          %v1639 = vld [vmem:[%s6 + $0x18] sm:$0xf]
          %v1640 = vld [vmem:[%s6 + $0x1c] sm:$0xf]
          %v1641 = vld [vmem:[%s6 + $0x20] sm:$0xf]
          %v1642 = vld [vmem:[%s6 + $0x24] sm:$0xf]
          %v1643 = vld [vmem:[%s6 + $0x28] sm:$0xf]
          %v1644 = vld [vmem:[%s6 + $0x2c] sm:$0xf]
          %v1645 = vld [vmem:[%s6 + $0x30] sm:$0xf]
          %v1646 = vld [vmem:[%s6 + $0x34] sm:$0xf]
          %v1647 = vld [vmem:[%s6 + $0x38] sm:$0xf]
          %v1648 = vld [vmem:[%s6 + $0x3c] sm:$0xf]
          %v1649 = vlaneseq
          %v1650 = vshrl.u32 %v1649, 7
          %v1651 = vsub.s32 0, %v1650
          %v1652 = vrot.slane %v1482, %v1651
          %v1669 = vunpack.c.l.b16 %v1633
          %v1670 = vunpack.c.l.b16 %v1634
          %v1671 = vunpack.c.l.b16 %v1635
          %v1672 = vunpack.c.l.b16 %v1636
          %v1673 = vunpack.c.l.b16 %v1637
          %v1674 = vunpack.c.l.b16 %v1638
          %v1675 = vunpack.c.l.b16 %v1639
          %v1676 = vunpack.c.l.b16 %v1640
          %v1677 = vunpack.c.l.b16 %v1641
          %v1678 = vunpack.c.l.b16 %v1642
          %v1679 = vunpack.c.l.b16 %v1643
          %v1680 = vunpack.c.l.b16 %v1644
          %v1681 = vunpack.c.l.b16 %v1645
          %v1682 = vunpack.c.l.b16 %v1646
          %v1683 = vunpack.c.l.b16 %v1647
          %v1684 = vunpack.c.l.b16 %v1648
          %v1685 = vpack.c.b16 %v1670, %v1669
          %v1686 = vpack.c.b16 %v1672, %v1671
          %v1687 = vpack.c.b16 %v1674, %v1673
          %v1688 = vpack.c.b16 %v1676, %v1675
          %v1689 = vpack.c.b16 %v1678, %v1677
          %v1690 = vpack.c.b16 %v1680, %v1679
          %v1691 = vpack.c.b16 %v1682, %v1681
          %v1692 = vpack.c.b16 %v1684, %v1683
          %1701 = vmatprep.subr.bf16.mxu0 0
          %1702 = vmatpush1.bf16.msra.mxu0 %v1692
          %1703 = vmatprep.subr.bf16.mxu0 0
          %1704 = vmatpush1.bf16.msra.mxu0 %v1691
          %1705 = vmatprep.subr.bf16.mxu0 0
          %1706 = vmatpush1.bf16.msra.mxu0 %v1690
          %1707 = vmatprep.subr.bf16.mxu0 0
          %1708 = vmatpush1.bf16.msra.mxu0 %v1689
          %1709 = vmatprep.subr.bf16.mxu0 0
          %1710 = vmatpush1.bf16.msra.mxu0 %v1688
          %1711 = vmatprep.subr.bf16.mxu0 0
          %1712 = vmatpush1.bf16.msra.mxu0 %v1687
          %1713 = vmatprep.subr.bf16.mxu0 0
          %1714 = vmatpush1.bf16.msra.mxu0 %v1686
          %1715 = vmatprep.subr.bf16.mxu0 0
          %1716 = vmatpush1.bf16.msra.mxu0 %v1685
          %1717 = vmatprep.subr.bf16.mxu0 0
          %1718 = vmatpush2.bf16.msra.mxu0 0
          %1719 = vmatprep.subr.bf16.mxu0 0
          %1720 = vmatpush2.bf16.msra.mxu0 0
          %1721 = vmatprep.subr.bf16.mxu0 0
          %1722 = vmatpush2.bf16.msra.mxu0 0
          %1723 = vmatprep.subr.bf16.mxu0 0
          %1724 = vmatpush2.bf16.msra.mxu0 0
          %1725 = vmatprep.subr.bf16.mxu0 0
          %1726 = vmatpush2.bf16.msra.mxu0 0
          %1727 = vmatprep.subr.bf16.mxu0 0
          %1728 = vmatpush2.bf16.msra.mxu0 0
          %1729 = vmatprep.subr.bf16.mxu0 0
          %1730 = vmatpush2.bf16.msra.mxu0 0
          %1731 = vmatprep.subr.bf16.mxu0 0
          %1732 = vmatpush2.bf16.msra.mxu0 0
          %1733 = vmatprep.mubr.bf16.mxu0 0
          %1734 = vmatmul.mubr.bf16.gmra.mxu0 %v1631
          %v1735 = vpop.f32.mrf.mxu0
          %v1736 = vadd.f32 %v1652, %v1735
          %v1737 = vpop.f32.mrf.mxu0
          %v1738 = vpop.f32.mrf.mxu0
          %v1739 = vadd.f32 %v1652, %v1738
          %v1740 = vpop.f32.mrf.mxu0
          %1741 = vmatprep.mubr.bf16.mxu0 0
          %1742 = vmatmul.mubr.bf16.gmra.mxu0 %v1632
          %v1743 = vpop.f32.mrf.mxu0
          %v1744 = vadd.f32 %v1652, %v1743
          %v1745 = vpop.f32.mrf.mxu0
          %v1746 = vpop.f32.mrf.mxu0
          %v1747 = vadd.f32 %v1652, %v1746
          %v1748 = vpop.f32.mrf.mxu0
          %1749 = vdwg.mxu0
          %v1750 = vxor.u32 %v1736, 2147483648
          %v1751 = vxor.u32 %v1739, 2147483648
          %v1752 = vxor.u32 %v1744, 2147483648
          %v1753 = vxor.u32 %v1747, 2147483648
          %v1754 = vmul.f32 %v1750, 1.442695
          %v1755 = vpow.pop %v1754
          %v1756 = vmul.f32 %v1751, 1.442695
          %v1757 = vpow.pop %v1756
          %v1758 = vmul.f32 %v1752, 1.442695
          %v1759 = vpow.pop %v1758
          %v1760 = vmul.f32 %v1753, 1.442695
          %v1761 = vpow.pop %v1760
          %v1762 = vadd.f32 %v1755, 1.0
          %v1763 = vadd.f32 %v1757, 1.0
          %v1764 = vadd.f32 %v1759, 1.0
          %v1765 = vadd.f32 %v1761, 1.0
          %v1766 = vrcp.pop %v1762
          %v1767 = vmul.f32 1.0, %v1766
          %v1768 = vrcp.pop %v1763
          %v1769 = vmul.f32 1.0, %v1768
          %v1770 = vrcp.pop %v1764
          %v1771 = vmul.f32 1.0, %v1770
          %v1772 = vrcp.pop %v1765
          %v1773 = vmul.f32 1.0, %v1772
          %v1774 = vmul.f32 %v1736, %v1767
          %v1775 = vmul.f32 %v1739, %v1769
          %v1776 = vmul.f32 %v1744, %v1771
          %v1777 = vmul.f32 %v1747, %v1773
          %v1778 = vpack.c.bf16 %v1775, %v1774
          %v1779 = vpack.c.bf16 %v1777, %v1776
          %v1780 = vld [vmem:[%s7] sm:$0xf]
          %v1781 = vld [vmem:[%s7 + $0x4] sm:$0xf]
          %v1782 = vld [vmem:[%s7 + $0x8] sm:$0xf]
          %v1783 = vld [vmem:[%s7 + $0xc] sm:$0xf]
          %v1784 = vld [vmem:[%s7 + $0x10] sm:$0xf]
          %v1785 = vld [vmem:[%s7 + $0x14] sm:$0xf]
          %v1786 = vld [vmem:[%s7 + $0x18] sm:$0xf]
          %v1787 = vld [vmem:[%s7 + $0x1c] sm:$0xf]
          %v1788 = vld [vmem:[%s7 + $0x20] sm:$0xf]
          %v1789 = vld [vmem:[%s7 + $0x24] sm:$0xf]
          %v1790 = vld [vmem:[%s7 + $0x28] sm:$0xf]
          %v1791 = vld [vmem:[%s7 + $0x2c] sm:$0xf]
          %v1792 = vld [vmem:[%s7 + $0x30] sm:$0xf]
          %v1793 = vld [vmem:[%s7 + $0x34] sm:$0xf]
          %v1794 = vld [vmem:[%s7 + $0x38] sm:$0xf]
          %v1795 = vld [vmem:[%s7 + $0x3c] sm:$0xf]
          %v1796 = vlaneseq
          %v1797 = vshrl.u32 %v1796, 7
          %v1798 = vsub.s32 0, %v1797
          %v1799 = vrot.slane %v1483, %v1798
          %v1816 = vunpack.c.l.b16 %v1780
          %v1817 = vunpack.c.l.b16 %v1781
          %v1818 = vunpack.c.l.b16 %v1782
          %v1819 = vunpack.c.l.b16 %v1783
          %v1820 = vunpack.c.l.b16 %v1784
          %v1821 = vunpack.c.l.b16 %v1785
          %v1822 = vunpack.c.l.b16 %v1786
          %v1823 = vunpack.c.l.b16 %v1787
          %v1824 = vunpack.c.l.b16 %v1788
          %v1825 = vunpack.c.l.b16 %v1789
          %v1826 = vunpack.c.l.b16 %v1790
          %v1827 = vunpack.c.l.b16 %v1791
          %v1828 = vunpack.c.l.b16 %v1792
          %v1829 = vunpack.c.l.b16 %v1793
          %v1830 = vunpack.c.l.b16 %v1794
          %v1831 = vunpack.c.l.b16 %v1795
          %v1832 = vpack.c.b16 %v1817, %v1816
          %v1833 = vpack.c.b16 %v1819, %v1818
          %v1834 = vpack.c.b16 %v1821, %v1820
          %v1835 = vpack.c.b16 %v1823, %v1822
          %v1836 = vpack.c.b16 %v1825, %v1824
          %v1837 = vpack.c.b16 %v1827, %v1826
          %v1838 = vpack.c.b16 %v1829, %v1828
          %v1839 = vpack.c.b16 %v1831, %v1830
          %1848 = vmatprep.subr.bf16.mxu0 0
          %1849 = vmatpush1.bf16.msra.mxu0 %v1839
          %1850 = vmatprep.subr.bf16.mxu0 0
          %1851 = vmatpush1.bf16.msra.mxu0 %v1838
          %1852 = vmatprep.subr.bf16.mxu0 0
          %1853 = vmatpush1.bf16.msra.mxu0 %v1837
          %1854 = vmatprep.subr.bf16.mxu0 0
          %1855 = vmatpush1.bf16.msra.mxu0 %v1836
          %1856 = vmatprep.subr.bf16.mxu0 0
          %1857 = vmatpush1.bf16.msra.mxu0 %v1835
          %1858 = vmatprep.subr.bf16.mxu0 0
          %1859 = vmatpush1.bf16.msra.mxu0 %v1834
          %1860 = vmatprep.subr.bf16.mxu0 0
          %1861 = vmatpush1.bf16.msra.mxu0 %v1833
          %1862 = vmatprep.subr.bf16.mxu0 0
          %1863 = vmatpush1.bf16.msra.mxu0 %v1832
          %1864 = vmatprep.subr.bf16.mxu0 0
          %1865 = vmatpush2.bf16.msra.mxu0 0
          %1866 = vmatprep.subr.bf16.mxu0 0
          %1867 = vmatpush2.bf16.msra.mxu0 0
          %1868 = vmatprep.subr.bf16.mxu0 0
          %1869 = vmatpush2.bf16.msra.mxu0 0
          %1870 = vmatprep.subr.bf16.mxu0 0
          %1871 = vmatpush2.bf16.msra.mxu0 0
          %1872 = vmatprep.subr.bf16.mxu0 0
          %1873 = vmatpush2.bf16.msra.mxu0 0
          %1874 = vmatprep.subr.bf16.mxu0 0
          %1875 = vmatpush2.bf16.msra.mxu0 0
          %1876 = vmatprep.subr.bf16.mxu0 0
          %1877 = vmatpush2.bf16.msra.mxu0 0
          %1878 = vmatprep.subr.bf16.mxu0 0
          %1879 = vmatpush2.bf16.msra.mxu0 0
          %1880 = vmatprep.mubr.bf16.mxu0 0
          %1881 = vmatmul.mubr.bf16.gmra.mxu0 %v1778
          %v1882 = vpop.f32.mrf.mxu0
          %v1883 = vadd.f32 %v1799, %v1882
          %v1884 = vpop.f32.mrf.mxu0
          %v1885 = vpop.f32.mrf.mxu0
          %v1886 = vadd.f32 %v1799, %v1885
          %v1887 = vpop.f32.mrf.mxu0
          %1888 = vmatprep.mubr.bf16.mxu0 0
          %1889 = vmatmul.mubr.bf16.gmra.mxu0 %v1779
          %v1890 = vpop.f32.mrf.mxu0
          %v1891 = vadd.f32 %v1799, %v1890
          %v1892 = vpop.f32.mrf.mxu0
          %v1893 = vpop.f32.mrf.mxu0
          %v1894 = vadd.f32 %v1799, %v1893
          %v1895 = vpop.f32.mrf.mxu0
          %1896 = vdwg.mxu0
          %1897 = vst [vmem:[#allocation3] sm:$0xff] %v1883
          %1898 = vst [vmem:[#allocation3 + $0x8] sm:$0xff] %v1886
          %1899 = vst [vmem:[#allocation3 + $0x10] sm:$0xff] %v1891
          %1900 = vst [vmem:[#allocation3 + $0x18] sm:$0xff] %v1894
        $region68: #{tpu_custom_call.1} parent=59 // pred_fallthru
          _
        // Predicated region
        $region69: #{tpu_custom_call.1} parent=59 // pred_check
          %p1901 = pneg %p255
        $region70: #{tpu_custom_call.1} parent=59 // pred_check_branch
          %1903 = sbr.rel (%p1901) target = $region72
        $region71: #{tpu_custom_call.1} parent=59 // pred_region
          %s1905 = ssub.s32 512, 512
          %1906 = vsyncadd [#allocation4], %s1905
          %s1907 = sshll.u32 [#allocation3], 4
          %s1908 = int_to_ptr.vmem [resolvable:$true] %s1907
          %1913 = dma.vmem_to_hbm [thread:$0]  %s1908, 512, %s10, [#allocation4], 128, 128, 8
        $region72: #{tpu_custom_call.1} parent=59 // pred_fallthru
          _
        // Predicated region
        $region73: #{tpu_custom_call.1} parent=59 // pred_check
          %p1914 = pneg %p255
        $region74: #{tpu_custom_call.1} parent=59 // pred_check_branch
          %1916 = sbr.rel (%p1914) target = $region76
        $region75: #{tpu_custom_call.1} parent=59 // pred_region
          %1917 = dma.done [#allocation4], 512
        $region76: #{tpu_custom_call.1} parent=59 // pred_fallthru
          _
      $region60: #{tpu_custom_call.1} parent=5 // pred_fallthru
        _
      %p1918 = scmp.le.s32.totalorder 2, %s17
      // Predicated region
      $region77: #{tpu_custom_call.1} parent=5 // pred_check
        %p1919 = pneg %p1918
      $region78: #{tpu_custom_call.1} parent=5 // pred_check_branch
        %1921 = sbr.rel (%p1919) target = $region80
      $region79: #{tpu_custom_call.1} parent=5 // pred_region
        %s1922 = ssub.s32 %s17, 2
      $region80: #{tpu_custom_call.1} parent=5 // pred_fallthru
        _
    $region6: #{tpu_custom_call.1} parent=1 // loop_footer
      %s21 = sadd.s32 1, %s17
    $region7: #{tpu_custom_call.1} parent=1 // loop_footer_branch
      %16 = sbr.rel target = $region3
    $region8: #{tpu_custom_call.1} parent=1 // loop_exit
      _
    %1923 = vsyncpa [#allocation4], 1
    %s1924 = scalar_lea.sflag [#allocation4], 1
    %1925 = vsyncpa %s1924, 1

</llo_original>
